<compile_context>
chip_gen: v5e
topology: v5e:2x2
jax: 0.10.0
libtpu: 0.0.40
codegen_flags: <defaults>
</compile_context>

<pallas_src>
import jax
import jax.numpy as jnp
from jax.experimental import pallas as pl
from jax.experimental.pallas import tpu as pltpu


# ---------------------------------------------------------------------------
# Fused Pallas kernel (one grid step per batch element)
# ---------------------------------------------------------------------------

def _fused_resblock_kernel(
    xe_ref,     # (1, Cin, E)   extended padded-flat input (E = P + 2*(W+3))
    mask_ref,   # (1, P)        1.0 at interior (valid) padded-grid positions
    w1_ref,     # (Cout, 9*Cin) block1 conv weight, tap-major columns
    b1_ref,     # (Cout, 1)
    g1_ref,     # (Cout, 1)     RMSNorm gain * sqrt(Cout)   (pre-folded)
    w2_ref,     # (Cout, 9*Cout)
    b2_ref,     # (Cout, 1)
    g2_ref,     # (Cout, 1)
    wr_ref,     # (Cout, Cin)   1x1 residual conv weight
    br_ref,     # (Cout, 1)
    sc_ref,     # (1, Cout, 1)  scale + 1 (pre-folded, from time MLP)
    sh_ref,     # (1, Cout, 1)  shift
    o_ref,      # (1, Cout, P)
    taps1_ref,  # VMEM (9*Cin, P)
    taps2_ref,  # VMEM (9*Cout, P)
    hext_ref,   # VMEM (Cout, E)
):
    Cin = xe_ref.shape[1]
    Cout = o_ref.shape[1]
    P = o_ref.shape[2]
    E = xe_ref.shape[2]
    margin = (E - P) // 2          # = W + 3
    Wp = margin - 1                # = W + 2  (padded row width)

    # ---- block1 taps: 9 statically shifted windows of the extended buffer ----
    for dy in range(3):
        for dx in range(3):
            k = 3 * dy + dx
            off = dy * Wp + dx
            taps1_ref[k * Cin:(k + 1) * Cin, :] = xe_ref[0, :, off:off + P]

    # ---- block1: conv3x3 as one K=9*Cin matmul + bias ----
    acc = jnp.dot(w1_ref[...], taps1_ref[...],
                  preferred_element_type=jnp.float32) + b1_ref[...]
    # RMSNorm over channels (sublane reduce) with rsqrt (EUP slot)
    ss = jnp.sum(acc * acc, axis=0, keepdims=True)              # (1, P)
    y = acc * jax.lax.rsqrt(jnp.maximum(ss, 1e-24)) * g1_ref[...]
    # scale/shift conditioning (scale already has +1 folded in) and SiLU
    y = y * sc_ref[0] + sh_ref[0]
    y = y * jax.nn.sigmoid(y)
    # TODO(synk): nn.Dropout is identity in eval / p=0.0, so it is omitted.

    # ---- write h back into zero-ringed padded-flat layout (stays in VMEM) ----
    hext_ref[:, 0:margin] = jnp.zeros((Cout, margin), jnp.float32)
    hext_ref[:, margin + P:E] = jnp.zeros((Cout, E - margin - P), jnp.float32)
    hext_ref[:, margin:margin + P] = y * mask_ref[...]

    # ---- block2 taps from VMEM-resident h, conv + RMSNorm + SiLU ----
    for dy in range(3):
        for dx in range(3):
            k = 3 * dy + dx
            off = dy * Wp + dx
            taps2_ref[k * Cout:(k + 1) * Cout, :] = hext_ref[:, off:off + P]
    acc = jnp.dot(w2_ref[...], taps2_ref[...],
                  preferred_element_type=jnp.float32) + b2_ref[...]
    ss = jnp.sum(acc * acc, axis=0, keepdims=True)
    y = acc * jax.lax.rsqrt(jnp.maximum(ss, 1e-24)) * g2_ref[...]
    y = y * jax.nn.sigmoid(y)

    # ---- fused 1x1 residual conv + add ----
    res = jnp.dot(wr_ref[...], xe_ref[0, :, margin:margin + P],
                  preferred_element_type=jnp.float32) + br_ref[...]
    o_ref[0] = y + res


# ---------------------------------------------------------------------------
# Wrapper (layout plumbing + pallas_call)
# ---------------------------------------------------------------------------

@jax.jit
def resnet_block_forward(x_nchw, time_emb, params):
    B, Cin, H, W = x_nchw.shape
    Cout = params["w1"].shape[0]
    Hp, Wp = H + 2, W + 2
    P = Hp * Wp
    margin = W + 3
    E = P + 2 * margin

    # ---- time MLP: tiny (B,T)@(T,2*Cout) -> plain JAX (per perf review) ----
    te = jax.nn.silu(time_emb) @ params["wm"] + params["bm"]
    scale_p1 = (te[:, :Cout] + 1.0).reshape(B, Cout, 1)     # fold the +1
    shift = te[:, Cout:].reshape(B, Cout, 1)

    # ---- layout plumbing (cheap, done once in JAX) ----
    xpad = jnp.pad(x_nchw, ((0, 0), (0, 0), (1, 1), (1, 1)))      # SAME padding
    xe = jnp.pad(xpad.reshape(B, Cin, P),
                 ((0, 0), (0, 0), (margin, margin)))              # (B, Cin, E)
    mask = jnp.pad(jnp.ones((H, W), jnp.float32),
                   ((1, 1), (1, 1))).reshape(1, P)

    def conv_w(w):  # (Cout, Cin, 3, 3) -> (Cout, 9*Cin), column = k*Cin + cin
        co, ci = w.shape[0], w.shape[1]
        return jnp.transpose(w, (0, 2, 3, 1)).reshape(co, 9 * ci)

    w1f = conv_w(params["w1"])
    w2f = conv_w(params["w2"])
    wr = params["wres"][:, :, 0, 0]                               # (Cout, Cin)
    col = lambda v: v.reshape(-1, 1)
    sqc = jnp.float32(Cout) ** 0.5
    g1s = col(params["g1"]) * sqc                                 # fold sqrt(C)
    g2s = col(params["g2"]) * sqc

    const2 = lambda b: (0, 0)
    per_b3 = lambda shape: pl.BlockSpec(shape, lambda b: (b, 0, 0))

    # TODO(synk): for production sizes (large H*W / C), tile the P axis across
    # the grid (with halo) and raise vmem_limit_bytes; toy dims fit VMEM whole.
    out = pl.pallas_call(
        _fused_resblock_kernel,
        out_shape=jax.ShapeDtypeStruct((B, Cout, P), jnp.float32),
        grid=(B,),
        in_specs=[
            per_b3((1, Cin, E)),                          # xe
            pl.BlockSpec((1, P), const2),                 # mask
            pl.BlockSpec((Cout, 9 * Cin), const2),        # w1
            pl.BlockSpec((Cout, 1), const2),              # b1
            pl.BlockSpec((Cout, 1), const2),              # g1*sqrt(C)
            pl.BlockSpec((Cout, 9 * Cout), const2),       # w2
            pl.BlockSpec((Cout, 1), const2),              # b2
            pl.BlockSpec((Cout, 1), const2),              # g2*sqrt(C)
            pl.BlockSpec((Cout, Cin), const2),            # wres (1x1)
            pl.BlockSpec((Cout, 1), const2),              # bres
            per_b3((1, Cout, 1)),                         # scale + 1
            per_b3((1, Cout, 1)),                         # shift
        ],
        out_specs=per_b3((1, Cout, P)),
        scratch_shapes=[
            pltpu.VMEM((9 * Cin, P), jnp.float32),        # block1 tap matrix
            pltpu.VMEM((9 * Cout, P), jnp.float32),       # block2 tap matrix
            pltpu.VMEM((Cout, E), jnp.float32),           # h in padded layout
        ],
        compiler_params=pltpu.CompilerParams(
            dimension_semantics=("parallel",)),
    )(xe, mask, w1f, col(params["b1"]), g1s,
      w2f, col(params["b2"]), g2s,
      wr, col(params["bres"]),
      scale_p1, shift)

    # (B, Cout, P) -> (B, Cout, H+2, W+2) -> strip padding ring -> NCHW
    return out.reshape(B, Cout, Hp, Wp)[:, :, 1:H + 1, 1:W + 1]


# ---------------------------------------------------------------------------
# Pure-JAX reference (for correctness check)
# ---------------------------------------------------------------------------

def ref_forward(x, t, p):
    Cout = p["w1"].shape[0]
    te = jax.nn.silu(t) @ p["wm"] + p["bm"]
    scale = te[:, :Cout][:, :, None, None]
    shift = te[:, Cout:][:, :, None, None]

    def conv(x, w, b):
        y = jax.lax.conv_general_dilated(
            x, w, (1, 1), "SAME", dimension_numbers=("NCHW", "OIHW", "NCHW"))
        return y + b[None, :, None, None]

    def rms(x, g):
        n = jnp.sqrt(jnp.sum(x * x, axis=1, keepdims=True))
        return x / jnp.maximum(n, 1e-12) * g[None, :, None, None] * \
            jnp.float32(x.shape[1]) ** 0.5

    h = conv(x, p["w1"], p["b1"])
    h = rms(h, p["g1"])
    h = h * (scale + 1.0) + shift
    h = jax.nn.silu(h)
    h = conv(h, p["w2"], p["b2"])
    h = rms(h, p["g2"])
    h = jax.nn.silu(h)
    res = conv(x, p["wres"], p["bres"])
    return h + res


# ---------------------------------------------------------------------------
# Main
# ---------------------------------------------------------------------------

if __name__ == "__main__":
    B, Cin, Cout, H, W, T = 2, 4, 8, 16, 16, 8

    key = jax.random.PRNGKey(0)
    keys = jax.random.split(key, 12)

    x = jax.random.normal(keys[0], (B, Cin, H, W), jnp.float32)
    time_emb = jax.random.normal(keys[1], (B, T), jnp.float32)

    params = {
        "w1": 0.1 * jax.random.normal(keys[2], (Cout, Cin, 3, 3), jnp.float32),
        "b1": 0.1 * jax.random.normal(keys[3], (Cout,), jnp.float32),
        "g1": 1.0 + 0.1 * jax.random.normal(keys[4], (Cout,), jnp.float32),
        "w2": 0.1 * jax.random.normal(keys[5], (Cout, Cout, 3, 3), jnp.float32),
        "b2": 0.1 * jax.random.normal(keys[6], (Cout,), jnp.float32),
        "g2": 1.0 + 0.1 * jax.random.normal(keys[7], (Cout,), jnp.float32),
        "wres": 0.1 * jax.random.normal(keys[8], (Cout, Cin, 1, 1), jnp.float32),
        "bres": 0.1 * jax.random.normal(keys[9], (Cout,), jnp.float32),
        "wm": 0.1 * jax.random.normal(keys[10], (T, 2 * Cout), jnp.float32),
        "bm": 0.1 * jax.random.normal(keys[11], (2 * Cout,), jnp.float32),
    }

    out = resnet_block_forward(x, time_emb, params)
    out = jax.block_until_ready(out)

    ref = ref_forward(x, time_emb, params)
    assert out.shape == (B, Cout, H, W), out.shape
    assert jnp.allclose(out, ref, atol=1e-4, rtol=1e-4), \
        float(jnp.max(jnp.abs(out - ref)))

    print("KERNEL_OK")
</pallas_src>

<mosaic_0001>
module attributes {stable_mosaic.version = 11 : i64} {
  func.func @_fused_resblock_kernel(%arg0: i32, %arg1: memref<1x4x362xf32, #tpu.memory_space<vmem>>, %arg2: memref<1x324xf32, #tpu.memory_space<vmem>>, %arg3: memref<8x36xf32, #tpu.memory_space<vmem>>, %arg4: memref<8x1xf32, #tpu.memory_space<vmem>>, %arg5: memref<8x1xf32, #tpu.memory_space<vmem>>, %arg6: memref<8x72xf32, #tpu.memory_space<vmem>>, %arg7: memref<8x1xf32, #tpu.memory_space<vmem>>, %arg8: memref<8x1xf32, #tpu.memory_space<vmem>>, %arg9: memref<8x4xf32, #tpu.memory_space<vmem>>, %arg10: memref<8x1xf32, #tpu.memory_space<vmem>>, %arg11: memref<1x8x1xf32, #tpu.memory_space<vmem>>, %arg12: memref<1x8x1xf32, #tpu.memory_space<vmem>>, %arg13: memref<1x8x324xf32, #tpu.memory_space<vmem>>, %arg14: memref<36x324xf32, #tpu.memory_space<vmem>>, %arg15: memref<72x324xf32, #tpu.memory_space<vmem>>, %arg16: memref<8x362xf32, #tpu.memory_space<vmem>>) attributes {dimension_semantics = [#tpu.dimension_semantics<parallel>], iteration_bounds = array<i64: 2>, scalar_prefetch = 0 : i64, scratch_operands = 3 : i64, tpu.core_type = #tpu.core_type<tc>, window_params = [{transform_indices = @transform_0, window_bounds = array<i64: 1, 4, 362>}, {pipeline_mode = #tpu.pipeline_mode<synchronous>, transform_indices = @transform_1, window_bounds = array<i64: 1, 324>}, {pipeline_mode = #tpu.pipeline_mode<synchronous>, transform_indices = @transform_2, window_bounds = array<i64: 8, 36>}, {pipeline_mode = #tpu.pipeline_mode<synchronous>, transform_indices = @transform_3, window_bounds = array<i64: 8, 1>}, {pipeline_mode = #tpu.pipeline_mode<synchronous>, transform_indices = @transform_4, window_bounds = array<i64: 8, 1>}, {pipeline_mode = #tpu.pipeline_mode<synchronous>, transform_indices = @transform_5, window_bounds = array<i64: 8, 72>}, {pipeline_mode = #tpu.pipeline_mode<synchronous>, transform_indices = @transform_6, window_bounds = array<i64: 8, 1>}, {pipeline_mode = #tpu.pipeline_mode<synchronous>, transform_indices = @transform_7, window_bounds = array<i64: 8, 1>}, {pipeline_mode = #tpu.pipeline_mode<synchronous>, transform_indices = @transform_8, window_bounds = array<i64: 8, 4>}, {pipeline_mode = #tpu.pipeline_mode<synchronous>, transform_indices = @transform_9, window_bounds = array<i64: 8, 1>}, {transform_indices = @transform_10, window_bounds = array<i64: 1, 8, 1>}, {transform_indices = @transform_11, window_bounds = array<i64: 1, 8, 1>}, {transform_indices = @transform_12, window_bounds = array<i64: 1, 8, 324>}]} {
    %c0 = arith.constant 0 : index
    %c0_0 = arith.constant 0 : index
    %c0_1 = arith.constant 0 : index
    %0 = vector.load %arg1[%c0, %c0_0, %c0_1] : memref<1x4x362xf32, #tpu.memory_space<vmem>>, vector<1x4x324xf32>
    %1 = vector.shape_cast %0 : vector<1x4x324xf32> to vector<4x324xf32>
    %c0_2 = arith.constant 0 : index
    %c0_3 = arith.constant 0 : index
    %2 = vector.load %arg14[%c0_2, %c0_3] : memref<36x324xf32, #tpu.memory_space<vmem>>, vector<4x324xf32>
    tpu.vector_store %arg14[%c0_2, %c0_3], %1 {strides = array<i32>} : memref<36x324xf32, #tpu.memory_space<vmem>>, vector<4x324xf32>,
    %c0_4 = arith.constant 0 : index
    %c0_5 = arith.constant 0 : index
    %c1 = arith.constant 1 : index
    %3 = vector.load %arg1[%c0_4, %c0_5, %c1] : memref<1x4x362xf32, #tpu.memory_space<vmem>>, vector<1x4x324xf32>
    %4 = vector.shape_cast %3 : vector<1x4x324xf32> to vector<4x324xf32>
    %c4 = arith.constant 4 : index
    %c0_6 = arith.constant 0 : index
    %5 = vector.load %arg14[%c4, %c0_6] : memref<36x324xf32, #tpu.memory_space<vmem>>, vector<4x324xf32>
    tpu.vector_store %arg14[%c4, %c0_6], %4 {strides = array<i32>} : memref<36x324xf32, #tpu.memory_space<vmem>>, vector<4x324xf32>,
    %c0_7 = arith.constant 0 : index
    %c0_8 = arith.constant 0 : index
    %c2 = arith.constant 2 : index
    %6 = vector.load %arg1[%c0_7, %c0_8, %c2] : memref<1x4x362xf32, #tpu.memory_space<vmem>>, vector<1x4x324xf32>
    %7 = vector.shape_cast %6 : vector<1x4x324xf32> to vector<4x324xf32>
    %c8 = arith.constant 8 : index
    %c0_9 = arith.constant 0 : index
    %8 = vector.load %arg14[%c8, %c0_9] : memref<36x324xf32, #tpu.memory_space<vmem>>, vector<4x324xf32>
    tpu.vector_store %arg14[%c8, %c0_9], %7 {strides = array<i32>} : memref<36x324xf32, #tpu.memory_space<vmem>>, vector<4x324xf32>,
    %c0_10 = arith.constant 0 : index
    %c0_11 = arith.constant 0 : index
    %c18 = arith.constant 18 : index
    %9 = vector.load %arg1[%c0_10, %c0_11, %c18] : memref<1x4x362xf32, #tpu.memory_space<vmem>>, vector<1x4x324xf32>
    %10 = vector.shape_cast %9 : vector<1x4x324xf32> to vector<4x324xf32>
    %c12 = arith.constant 12 : index
    %c0_12 = arith.constant 0 : index
    %11 = vector.load %arg14[%c12, %c0_12] : memref<36x324xf32, #tpu.memory_space<vmem>>, vector<4x324xf32>
    tpu.vector_store %arg14[%c12, %c0_12], %10 {strides = array<i32>} : memref<36x324xf32, #tpu.memory_space<vmem>>, vector<4x324xf32>,
    %c0_13 = arith.constant 0 : index
    %c0_14 = arith.constant 0 : index
    %c19 = arith.constant 19 : index
    %12 = vector.load %arg1[%c0_13, %c0_14, %c19] : memref<1x4x362xf32, #tpu.memory_space<vmem>>, vector<1x4x324xf32>
    %13 = vector.shape_cast %12 : vector<1x4x324xf32> to vector<4x324xf32>
    %c16 = arith.constant 16 : index
    %c0_15 = arith.constant 0 : index
    %14 = vector.load %arg14[%c16, %c0_15] : memref<36x324xf32, #tpu.memory_space<vmem>>, vector<4x324xf32>
    tpu.vector_store %arg14[%c16, %c0_15], %13 {strides = array<i32>} : memref<36x324xf32, #tpu.memory_space<vmem>>, vector<4x324xf32>,
    %c0_16 = arith.constant 0 : index
    %c0_17 = arith.constant 0 : index
    %c20 = arith.constant 20 : index
    %15 = vector.load %arg1[%c0_16, %c0_17, %c20] : memref<1x4x362xf32, #tpu.memory_space<vmem>>, vector<1x4x324xf32>
    %16 = vector.shape_cast %15 : vector<1x4x324xf32> to vector<4x324xf32>
    %c20_18 = arith.constant 20 : index
    %c0_19 = arith.constant 0 : index
    %17 = vector.load %arg14[%c20_18, %c0_19] : memref<36x324xf32, #tpu.memory_space<vmem>>, vector<4x324xf32>
    tpu.vector_store %arg14[%c20_18, %c0_19], %16 {strides = array<i32>} : memref<36x324xf32, #tpu.memory_space<vmem>>, vector<4x324xf32>,
    %c0_20 = arith.constant 0 : index
    %c0_21 = arith.constant 0 : index
    %c36 = arith.constant 36 : index
    %18 = vector.load %arg1[%c0_20, %c0_21, %c36] : memref<1x4x362xf32, #tpu.memory_space<vmem>>, vector<1x4x324xf32>
    %19 = vector.shape_cast %18 : vector<1x4x324xf32> to vector<4x324xf32>
    %c24 = arith.constant 24 : index
    %c0_22 = arith.constant 0 : index
    %20 = vector.load %arg14[%c24, %c0_22] : memref<36x324xf32, #tpu.memory_space<vmem>>, vector<4x324xf32>
    tpu.vector_store %arg14[%c24, %c0_22], %19 {strides = array<i32>} : memref<36x324xf32, #tpu.memory_space<vmem>>, vector<4x324xf32>,
    %c0_23 = arith.constant 0 : index
    %c0_24 = arith.constant 0 : index
    %c37 = arith.constant 37 : index
    %21 = vector.load %arg1[%c0_23, %c0_24, %c37] : memref<1x4x362xf32, #tpu.memory_space<vmem>>, vector<1x4x324xf32>
    %22 = vector.shape_cast %21 : vector<1x4x324xf32> to vector<4x324xf32>
    %c28 = arith.constant 28 : index
    %c0_25 = arith.constant 0 : index
    %23 = vector.load %arg14[%c28, %c0_25] : memref<36x324xf32, #tpu.memory_space<vmem>>, vector<4x324xf32>
    tpu.vector_store %arg14[%c28, %c0_25], %22 {strides = array<i32>} : memref<36x324xf32, #tpu.memory_space<vmem>>, vector<4x324xf32>,
    %c0_26 = arith.constant 0 : index
    %c0_27 = arith.constant 0 : index
    %c38 = arith.constant 38 : index
    %24 = vector.load %arg1[%c0_26, %c0_27, %c38] : memref<1x4x362xf32, #tpu.memory_space<vmem>>, vector<1x4x324xf32>
    %25 = vector.shape_cast %24 : vector<1x4x324xf32> to vector<4x324xf32>
    %c32 = arith.constant 32 : index
    %c0_28 = arith.constant 0 : index
    %26 = vector.load %arg14[%c32, %c0_28] : memref<36x324xf32, #tpu.memory_space<vmem>>, vector<4x324xf32>
    tpu.vector_store %arg14[%c32, %c0_28], %25 {strides = array<i32>} : memref<36x324xf32, #tpu.memory_space<vmem>>, vector<4x324xf32>,
    %c0_29 = arith.constant 0 : index
    %c0_30 = arith.constant 0 : index
    %27 = vector.load %arg3[%c0_29, %c0_30] : memref<8x36xf32, #tpu.memory_space<vmem>>, vector<8x36xf32>
    %c0_31 = arith.constant 0 : index
    %c0_32 = arith.constant 0 : index
    %28 = vector.load %arg14[%c0_31, %c0_32] : memref<36x324xf32, #tpu.memory_space<vmem>>, vector<36x324xf32>
    %cst = arith.constant dense<0.000000e+00> : vector<8x324xf32>
    %29 = tpu.matmul %27, %28, %cst {dimension_numbers = #tpu.dot_dimension_numbers<[1], [0], [0], [1], [0, 0, 1, 1], [], []>} : vector<8x36xf32>, vector<36x324xf32>, vector<8x324xf32> -> vector<8x324xf32>
    %c0_33 = arith.constant 0 : index
    %c0_34 = arith.constant 0 : index
    %30 = vector.load %arg4[%c0_33, %c0_34] : memref<8x1xf32, #tpu.memory_space<vmem>>, vector<8x1xf32>
    %31 = vector.broadcast %30 : vector<8x1xf32> to vector<8x324xf32>
    %32 = arith.addf %29, %31 : vector<8x324xf32>
    %33 = arith.mulf %32, %32 : vector<8x324xf32>
    %cst_35 = arith.constant dense<0.000000e+00> : vector<324xf32>
    %34 = vector.multi_reduction <add>, %33, %cst_35 [0] : vector<8x324xf32> to vector<324xf32>
    %35 = vector.shape_cast %34 : vector<324xf32> to vector<1x324xf32>
    %cst_36 = arith.constant 1.000000e-24 : f32
    %36 = vector.broadcast %cst_36 : f32 to vector<1x324xf32>
    %37 = arith.maximumf %35, %36 : vector<1x324xf32>
    %38 = math.rsqrt %37 : vector<1x324xf32>
    %39 = vector.broadcast %38 : vector<1x324xf32> to vector<8x324xf32>
    %40 = arith.mulf %32, %39 : vector<8x324xf32>
    %c0_37 = arith.constant 0 : index
    %c0_38 = arith.constant 0 : index
    %41 = vector.load %arg5[%c0_37, %c0_38] : memref<8x1xf32, #tpu.memory_space<vmem>>, vector<8x1xf32>
    %42 = vector.broadcast %41 : vector<8x1xf32> to vector<8x324xf32>
    %43 = arith.mulf %40, %42 : vector<8x324xf32>
    %c0_39 = arith.constant 0 : index
    %c0_40 = arith.constant 0 : index
    %c0_41 = arith.constant 0 : index
    %44 = vector.load %arg11[%c0_39, %c0_40, %c0_41] : memref<1x8x1xf32, #tpu.memory_space<vmem>>, vector<1x8x1xf32>
    %45 = vector.shape_cast %44 : vector<1x8x1xf32> to vector<8x1xf32>
    %46 = vector.broadcast %45 : vector<8x1xf32> to vector<8x324xf32>
    %47 = arith.mulf %43, %46 : vector<8x324xf32>
    %c0_42 = arith.constant 0 : index
    %c0_43 = arith.constant 0 : index
    %c0_44 = arith.constant 0 : index
    %48 = vector.load %arg12[%c0_42, %c0_43, %c0_44] : memref<1x8x1xf32, #tpu.memory_space<vmem>>, vector<1x8x1xf32>
    %49 = vector.shape_cast %48 : vector<1x8x1xf32> to vector<8x1xf32>
    %50 = vector.broadcast %49 : vector<8x1xf32> to vector<8x324xf32>
    %51 = arith.addf %47, %50 : vector<8x324xf32>
    %52 = arith.negf %51 : vector<8x324xf32>
    %53 = math.exp %52 : vector<8x324xf32>
    %cst_45 = arith.constant 1.000000e+00 : f32
    %54 = vector.broadcast %cst_45 : f32 to vector<8x324xf32>
    %55 = arith.addf %54, %53 : vector<8x324xf32>
    %56 = arith.divf %54, %55 : vector<8x324xf32>
    %57 = arith.mulf %51, %56 : vector<8x324xf32>
    %cst_46 = arith.constant 0.000000e+00 : f32
    %58 = vector.broadcast %cst_46 : f32 to vector<8x19xf32>
    %c0_47 = arith.constant 0 : index
    %c0_48 = arith.constant 0 : index
    %59 = vector.load %arg16[%c0_47, %c0_48] : memref<8x362xf32, #tpu.memory_space<vmem>>, vector<8x19xf32>
    tpu.vector_store %arg16[%c0_47, %c0_48], %58 {strides = array<i32>} : memref<8x362xf32, #tpu.memory_space<vmem>>, vector<8x19xf32>,
    %cst_49 = arith.constant 0.000000e+00 : f32
    %60 = vector.broadcast %cst_49 : f32 to vector<8x19xf32>
    %c0_50 = arith.constant 0 : index
    %c343 = arith.constant 343 : index
    %61 = vector.load %arg16[%c0_50, %c343] : memref<8x362xf32, #tpu.memory_space<vmem>>, vector<8x19xf32>
    tpu.vector_store %arg16[%c0_50, %c343], %60 {strides = array<i32>} : memref<8x362xf32, #tpu.memory_space<vmem>>, vector<8x19xf32>,
    %c0_51 = arith.constant 0 : index
    %c0_52 = arith.constant 0 : index
    %62 = vector.load %arg2[%c0_51, %c0_52] : memref<1x324xf32, #tpu.memory_space<vmem>>, vector<1x324xf32>
    %63 = vector.broadcast %62 : vector<1x324xf32> to vector<8x324xf32>
    %64 = arith.mulf %57, %63 : vector<8x324xf32>
    %c0_53 = arith.constant 0 : index
    %c19_54 = arith.constant 19 : index
    %65 = vector.load %arg16[%c0_53, %c19_54] : memref<8x362xf32, #tpu.memory_space<vmem>>, vector<8x324xf32>
    tpu.vector_store %arg16[%c0_53, %c19_54], %64 {strides = array<i32>} : memref<8x362xf32, #tpu.memory_space<vmem>>, vector<8x324xf32>,
    %c0_55 = arith.constant 0 : index
    %c0_56 = arith.constant 0 : index
    %66 = vector.load %arg16[%c0_55, %c0_56] : memref<8x362xf32, #tpu.memory_space<vmem>>, vector<8x324xf32>
    %c0_57 = arith.constant 0 : index
    %c0_58 = arith.constant 0 : index
    %67 = vector.load %arg15[%c0_57, %c0_58] : memref<72x324xf32, #tpu.memory_space<vmem>>, vector<8x324xf32>
    tpu.vector_store %arg15[%c0_57, %c0_58], %66 {strides = array<i32>} : memref<72x324xf32, #tpu.memory_space<vmem>>, vector<8x324xf32>,
    %c0_59 = arith.constant 0 : index
    %c1_60 = arith.constant 1 : index
    %68 = vector.load %arg16[%c0_59, %c1_60] : memref<8x362xf32, #tpu.memory_space<vmem>>, vector<8x324xf32>
    %c8_61 = arith.constant 8 : index
    %c0_62 = arith.constant 0 : index
    %69 = vector.load %arg15[%c8_61, %c0_62] : memref<72x324xf32, #tpu.memory_space<vmem>>, vector<8x324xf32>
    tpu.vector_store %arg15[%c8_61, %c0_62], %68 {strides = array<i32>} : memref<72x324xf32, #tpu.memory_space<vmem>>, vector<8x324xf32>,
    %c0_63 = arith.constant 0 : index
    %c2_64 = arith.constant 2 : index
    %70 = vector.load %arg16[%c0_63, %c2_64] : memref<8x362xf32, #tpu.memory_space<vmem>>, vector<8x324xf32>
    %c16_65 = arith.constant 16 : index
    %c0_66 = arith.constant 0 : index
    %71 = vector.load %arg15[%c16_65, %c0_66] : memref<72x324xf32, #tpu.memory_space<vmem>>, vector<8x324xf32>
    tpu.vector_store %arg15[%c16_65, %c0_66], %70 {strides = array<i32>} : memref<72x324xf32, #tpu.memory_space<vmem>>, vector<8x324xf32>,
    %c0_67 = arith.constant 0 : index
    %c18_68 = arith.constant 18 : index
    %72 = vector.load %arg16[%c0_67, %c18_68] : memref<8x362xf32, #tpu.memory_space<vmem>>, vector<8x324xf32>
    %c24_69 = arith.constant 24 : index
    %c0_70 = arith.constant 0 : index
    %73 = vector.load %arg15[%c24_69, %c0_70] : memref<72x324xf32, #tpu.memory_space<vmem>>, vector<8x324xf32>
    tpu.vector_store %arg15[%c24_69, %c0_70], %72 {strides = array<i32>} : memref<72x324xf32, #tpu.memory_space<vmem>>, vector<8x324xf32>,
    %c0_71 = arith.constant 0 : index
    %c19_72 = arith.constant 19 : index
    %74 = vector.load %arg16[%c0_71, %c19_72] : memref<8x362xf32, #tpu.memory_space<vmem>>, vector<8x324xf32>
    %c32_73 = arith.constant 32 : index
    %c0_74 = arith.constant 0 : index
    %75 = vector.load %arg15[%c32_73, %c0_74] : memref<72x324xf32, #tpu.memory_space<vmem>>, vector<8x324xf32>
    tpu.vector_store %arg15[%c32_73, %c0_74], %74 {strides = array<i32>} : memref<72x324xf32, #tpu.memory_space<vmem>>, vector<8x324xf32>,
    %c0_75 = arith.constant 0 : index
    %c20_76 = arith.constant 20 : index
    %76 = vector.load %arg16[%c0_75, %c20_76] : memref<8x362xf32, #tpu.memory_space<vmem>>, vector<8x324xf32>
    %c40 = arith.constant 40 : index
    %c0_77 = arith.constant 0 : index
    %77 = vector.load %arg15[%c40, %c0_77] : memref<72x324xf32, #tpu.memory_space<vmem>>, vector<8x324xf32>
    tpu.vector_store %arg15[%c40, %c0_77], %76 {strides = array<i32>} : memref<72x324xf32, #tpu.memory_space<vmem>>, vector<8x324xf32>,
    %c0_78 = arith.constant 0 : index
    %c36_79 = arith.constant 36 : index
    %78 = vector.load %arg16[%c0_78, %c36_79] : memref<8x362xf32, #tpu.memory_space<vmem>>, vector<8x324xf32>
    %c48 = arith.constant 48 : index
    %c0_80 = arith.constant 0 : index
    %79 = vector.load %arg15[%c48, %c0_80] : memref<72x324xf32, #tpu.memory_space<vmem>>, vector<8x324xf32>
    tpu.vector_store %arg15[%c48, %c0_80], %78 {strides = array<i32>} : memref<72x324xf32, #tpu.memory_space<vmem>>, vector<8x324xf32>,
    %c0_81 = arith.constant 0 : index
    %c37_82 = arith.constant 37 : index
    %80 = vector.load %arg16[%c0_81, %c37_82] : memref<8x362xf32, #tpu.memory_space<vmem>>, vector<8x324xf32>
    %c56 = arith.constant 56 : index
    %c0_83 = arith.constant 0 : index
    %81 = vector.load %arg15[%c56, %c0_83] : memref<72x324xf32, #tpu.memory_space<vmem>>, vector<8x324xf32>
    tpu.vector_store %arg15[%c56, %c0_83], %80 {strides = array<i32>} : memref<72x324xf32, #tpu.memory_space<vmem>>, vector<8x324xf32>,
    %c0_84 = arith.constant 0 : index
    %c38_85 = arith.constant 38 : index
    %82 = vector.load %arg16[%c0_84, %c38_85] : memref<8x362xf32, #tpu.memory_space<vmem>>, vector<8x324xf32>
    %c64 = arith.constant 64 : index
    %c0_86 = arith.constant 0 : index
    %83 = vector.load %arg15[%c64, %c0_86] : memref<72x324xf32, #tpu.memory_space<vmem>>, vector<8x324xf32>
    tpu.vector_store %arg15[%c64, %c0_86], %82 {strides = array<i32>} : memref<72x324xf32, #tpu.memory_space<vmem>>, vector<8x324xf32>,
    %c0_87 = arith.constant 0 : index
    %c0_88 = arith.constant 0 : index
    %84 = vector.load %arg6[%c0_87, %c0_88] : memref<8x72xf32, #tpu.memory_space<vmem>>, vector<8x72xf32>
    %c0_89 = arith.constant 0 : index
    %c0_90 = arith.constant 0 : index
    %85 = vector.load %arg15[%c0_89, %c0_90] : memref<72x324xf32, #tpu.memory_space<vmem>>, vector<72x324xf32>
    %cst_91 = arith.constant dense<0.000000e+00> : vector<8x324xf32>
    %86 = tpu.matmul %84, %85, %cst_91 {dimension_numbers = #tpu.dot_dimension_numbers<[1], [0], [0], [1], [0, 0, 1, 1], [], []>} : vector<8x72xf32>, vector<72x324xf32>, vector<8x324xf32> -> vector<8x324xf32>
    %c0_92 = arith.constant 0 : index
    %c0_93 = arith.constant 0 : index
    %87 = vector.load %arg7[%c0_92, %c0_93] : memref<8x1xf32, #tpu.memory_space<vmem>>, vector<8x1xf32>
    %88 = vector.broadcast %87 : vector<8x1xf32> to vector<8x324xf32>
    %89 = arith.addf %86, %88 : vector<8x324xf32>
    %90 = arith.mulf %89, %89 : vector<8x324xf32>
    %cst_94 = arith.constant dense<0.000000e+00> : vector<324xf32>
    %91 = vector.multi_reduction <add>, %90, %cst_94 [0] : vector<8x324xf32> to vector<324xf32>
    %92 = vector.shape_cast %91 : vector<324xf32> to vector<1x324xf32>
    %cst_95 = arith.constant 1.000000e-24 : f32
    %93 = vector.broadcast %cst_95 : f32 to vector<1x324xf32>
    %94 = arith.maximumf %92, %93 : vector<1x324xf32>
    %95 = math.rsqrt %94 : vector<1x324xf32>
    %96 = vector.broadcast %95 : vector<1x324xf32> to vector<8x324xf32>
    %97 = arith.mulf %89, %96 : vector<8x324xf32>
    %c0_96 = arith.constant 0 : index
    %c0_97 = arith.constant 0 : index
    %98 = vector.load %arg8[%c0_96, %c0_97] : memref<8x1xf32, #tpu.memory_space<vmem>>, vector<8x1xf32>
    %99 = vector.broadcast %98 : vector<8x1xf32> to vector<8x324xf32>
    %100 = arith.mulf %97, %99 : vector<8x324xf32>
    %101 = arith.negf %100 : vector<8x324xf32>
    %102 = math.exp %101 : vector<8x324xf32>
    %cst_98 = arith.constant 1.000000e+00 : f32
    %103 = vector.broadcast %cst_98 : f32 to vector<8x324xf32>
    %104 = arith.addf %103, %102 : vector<8x324xf32>
    %105 = arith.divf %103, %104 : vector<8x324xf32>
    %106 = arith.mulf %100, %105 : vector<8x324xf32>
    %c0_99 = arith.constant 0 : index
    %c0_100 = arith.constant 0 : index
    %107 = vector.load %arg9[%c0_99, %c0_100] : memref<8x4xf32, #tpu.memory_space<vmem>>, vector<8x4xf32>
    %c0_101 = arith.constant 0 : index
    %c0_102 = arith.constant 0 : index
    %c19_103 = arith.constant 19 : index
    %108 = vector.load %arg1[%c0_101, %c0_102, %c19_103] : memref<1x4x362xf32, #tpu.memory_space<vmem>>, vector<1x4x324xf32>
    %109 = vector.shape_cast %108 : vector<1x4x324xf32> to vector<4x324xf32>
    %cst_104 = arith.constant dense<0.000000e+00> : vector<8x324xf32>
    %110 = tpu.matmul %107, %109, %cst_104 {dimension_numbers = #tpu.dot_dimension_numbers<[1], [0], [0], [1], [0, 0, 1, 1], [], []>} : vector<8x4xf32>, vector<4x324xf32>, vector<8x324xf32> -> vector<8x324xf32>
    %c0_105 = arith.constant 0 : index
    %c0_106 = arith.constant 0 : index
    %111 = vector.load %arg10[%c0_105, %c0_106] : memref<8x1xf32, #tpu.memory_space<vmem>>, vector<8x1xf32>
    %112 = vector.broadcast %111 : vector<8x1xf32> to vector<8x324xf32>
    %113 = arith.addf %110, %112 : vector<8x324xf32>
    %114 = arith.addf %106, %113 : vector<8x324xf32>
    %c0_107 = arith.constant 0 : index
    %c0_108 = arith.constant 0 : index
    %c0_109 = arith.constant 0 : index
    %115 = vector.load %arg13[%c0_107, %c0_108, %c0_109] : memref<1x8x324xf32, #tpu.memory_space<vmem>>, vector<1x8x324xf32>
    %116 = vector.shape_cast %115 : vector<1x8x324xf32> to vector<8x324xf32>
    %117 = vector.shape_cast %114 : vector<8x324xf32> to vector<1x8x324xf32>
    tpu.vector_store %arg13[%c0_107, %c0_108, %c0_109], %117 {strides = array<i32>} : memref<1x8x324xf32, #tpu.memory_space<vmem>>, vector<1x8x324xf32>,
    return
  }
  func.func @transform_0(%arg0: i32) -> (i32, i32, i32) {
    %c0_i32 = arith.constant 0 : i32
    %c0_i32_0 = arith.constant 0 : i32
    %c0_i32_1 = arith.constant 0 : i32
    return %arg0, %c0_i32, %c0_i32_0 : i32, i32, i32
  }
  func.func @transform_1(%arg0: i32) -> (i32, i32) {
    %c0_i32 = arith.constant 0 : i32
    %c0_i32_0 = arith.constant 0 : i32
    %c0_i32_1 = arith.constant 0 : i32
    return %c0_i32, %c0_i32_0 : i32, i32
  }
  func.func @transform_2(%arg0: i32) -> (i32, i32) {
    %c0_i32 = arith.constant 0 : i32
    %c0_i32_0 = arith.constant 0 : i32
    %c0_i32_1 = arith.constant 0 : i32
    return %c0_i32, %c0_i32_0 : i32, i32
  }
  func.func @transform_3(%arg0: i32) -> (i32, i32) {
    %c0_i32 = arith.constant 0 : i32
    %c0_i32_0 = arith.constant 0 : i32
    %c0_i32_1 = arith.constant 0 : i32
    return %c0_i32, %c0_i32_0 : i32, i32
  }
  func.func @transform_4(%arg0: i32) -> (i32, i32) {
    %c0_i32 = arith.constant 0 : i32
    %c0_i32_0 = arith.constant 0 : i32
    %c0_i32_1 = arith.constant 0 : i32
    return %c0_i32, %c0_i32_0 : i32, i32
  }
  func.func @transform_5(%arg0: i32) -> (i32, i32) {
    %c0_i32 = arith.constant 0 : i32
    %c0_i32_0 = arith.constant 0 : i32
    %c0_i32_1 = arith.constant 0 : i32
    return %c0_i32, %c0_i32_0 : i32, i32
  }
  func.func @transform_6(%arg0: i32) -> (i32, i32) {
    %c0_i32 = arith.constant 0 : i32
    %c0_i32_0 = arith.constant 0 : i32
    %c0_i32_1 = arith.constant 0 : i32
    return %c0_i32, %c0_i32_0 : i32, i32
  }
  func.func @transform_7(%arg0: i32) -> (i32, i32) {
    %c0_i32 = arith.constant 0 : i32
    %c0_i32_0 = arith.constant 0 : i32
    %c0_i32_1 = arith.constant 0 : i32
    return %c0_i32, %c0_i32_0 : i32, i32
  }
  func.func @transform_8(%arg0: i32) -> (i32, i32) {
    %c0_i32 = arith.constant 0 : i32
    %c0_i32_0 = arith.constant 0 : i32
    %c0_i32_1 = arith.constant 0 : i32
    return %c0_i32, %c0_i32_0 : i32, i32
  }
  func.func @transform_9(%arg0: i32) -> (i32, i32) {
    %c0_i32 = arith.constant 0 : i32
    %c0_i32_0 = arith.constant 0 : i32
    %c0_i32_1 = arith.constant 0 : i32
    return %c0_i32, %c0_i32_0 : i32, i32
  }
  func.func @transform_10(%arg0: i32) -> (i32, i32, i32) {
    %c0_i32 = arith.constant 0 : i32
    %c0_i32_0 = arith.constant 0 : i32
    %c0_i32_1 = arith.constant 0 : i32
    return %arg0, %c0_i32, %c0_i32_0 : i32, i32, i32
  }
  func.func @transform_11(%arg0: i32) -> (i32, i32, i32) {
    %c0_i32 = arith.constant 0 : i32
    %c0_i32_0 = arith.constant 0 : i32
    %c0_i32_1 = arith.constant 0 : i32
    return %arg0, %c0_i32, %c0_i32_0 : i32, i32, i32
  }
  func.func @transform_12(%arg0: i32) -> (i32, i32, i32) {
    %c0_i32 = arith.constant 0 : i32
    %c0_i32_0 = arith.constant 0 : i32
    %c0_i32_1 = arith.constant 0 : i32
    return %arg0, %c0_i32, %c0_i32_0 : i32, i32, i32
  }
}

</mosaic_0001>

<llo_original>
// kernel: resnet_block_forward.1
$region0: #{resnet_block_forward.1}
  #allocation0 [shape = 'u32[]', space=smem, size = 0x4, offset = 0x4, fixed_abs, tag = 'smem constant byte address 0x4 - core index']
  #allocation1 [shape = 'u32[72,128]{1,0:T(1,128)}', space=vmem, size = 0x9000, scoped, tag = 'internal scratch']
  #allocation2 [shape = 'f32[36,324]{1,0:T(8,128)}', space=vmem, size = 0xf000, scoped, tag = 'scratch operand']
  #allocation3 [shape = 'f32[72,324]{1,0:T(8,128)}', space=vmem, size = 0x1b000, scoped, tag = 'scratch operand']
  #allocation4 [shape = 'f32[8,362]{1,0:T(8,128)}', space=vmem, size = 0x3000, scoped, tag = 'scratch operand']
  %s0 = inlined_call_operand.vmem [shape: f32[2,4,362], index: 0, kind: input, shape index: {}]
  %s1 = inlined_call_operand.vmem [shape: f32[1,324], index: 1, kind: input, shape index: {}]
  %s2 = inlined_call_operand.vmem [shape: f32[8,36], index: 2, kind: input, shape index: {}]
  %s3 = inlined_call_operand.vmem [shape: f32[8,1], index: 3, kind: input, shape index: {}]
  %s4 = inlined_call_operand.vmem [shape: f32[8,1], index: 4, kind: input, shape index: {}]
  %s5 = inlined_call_operand.vmem [shape: f32[8,72], index: 5, kind: input, shape index: {}]
  %s6 = inlined_call_operand.vmem [shape: f32[8,1], index: 6, kind: input, shape index: {}]
  %s7 = inlined_call_operand.vmem [shape: f32[8,1], index: 7, kind: input, shape index: {}]
  %s8 = inlined_call_operand.vmem [shape: f32[8,4], index: 8, kind: input, shape index: {}]
  %s9 = inlined_call_operand.vmem [shape: f32[8,1], index: 9, kind: input, shape index: {}]
  %s10 = inlined_call_operand.vmem [shape: f32[2,8,1], index: 10, kind: input, shape index: {}]
  %s11 = inlined_call_operand.vmem [shape: f32[2,8,1], index: 11, kind: input, shape index: {}]
  %s12 = inlined_call_operand.vmem [shape: f32[2,8,324], index: 12, kind: output, shape index: {}]
  %s13 = sld [smem:[#allocation0]]
  $region81: #{resnet_block_forward.1} parent=0
    _
  %s15 = ssub.s32 1, %s13
  %s16 = scalar_select 0, %s15, %s13
  loop: start=0, step=1, limit=4
  $region2: #{resnet_block_forward.1} parent=0 // loop_pre_header
    _
  $region3: #{resnet_block_forward.1} parent=0 // loop_header
    %s18 = sphi 0, %s22
    %p19 = scmp.ge.s32.totalorder %s18, 4
    %s28 = sphi 0, %s30
    %s31 = sphi 0, %s28
    %s32 = sphi 0, %s31
    %s48 = sphi 0, %s32
    %s52 = sphi 0, %s52
    %s54 = sphi 0, %s52
    %s55 = sphi 0, %s54
    %s69 = sphi 0, %s55
    %s73 = sphi 0, %s73
    %s75 = sphi 0, %s73
    %s76 = sphi 0, %s75
    %s90 = sphi 0, %s76
    %s94 = sphi 0, %s94
    %s96 = sphi 0, %s94
    %s97 = sphi 0, %s96
    %s111 = sphi 0, %s97
    %s115 = sphi 0, %s115
    %s117 = sphi 0, %s115
    %s118 = sphi 0, %s117
    %s132 = sphi 0, %s118
    %s136 = sphi 0, %s136
    %s138 = sphi 0, %s136
    %s139 = sphi 0, %s138
    %s153 = sphi 0, %s139
    %s157 = sphi 0, %s157
    %s159 = sphi 0, %s157
    %s160 = sphi 0, %s159
    %s174 = sphi 0, %s160
    %s178 = sphi 0, %s178
    %s180 = sphi 0, %s178
    %s181 = sphi 0, %s180
    %s195 = sphi 0, %s181
    %s199 = sphi 0, %s199
    %s201 = sphi 0, %s199
    %s202 = sphi 0, %s201
    %s216 = sphi 0, %s202
    %s220 = sphi 0, %s220
    %s222 = sphi 0, %s220
    %s223 = sphi 0, %s222
    %s237 = sphi 0, %s223
    %s243 = sphi 0, %s245
    %s246 = sphi 0, %s243
    %s247 = sphi 0, %s246
    %s263 = sphi 0, %s247
    %s269 = sphi 0, %s271
    %s272 = sphi 0, %s269
    %s273 = sphi 0, %s272
    %s289 = sphi 0, %s273
    %s295 = sphi 0, %s297
    %s298 = sphi 0, %s295
    %s299 = sphi 0, %s298
    %s315 = sphi 0, %s299
  $region4: #{resnet_block_forward.1} parent=0 // loop_header_branch
    %21 = sbr.rel (%p19) target = $region8
  $region5: #{resnet_block_forward.1} parent=0 // loop_body
    %s23 = ssub.s32 %s18, 1
    %s24 = ssub.s32 %s18, 2
    %s25 = sadd.s32 %s18, 1
    %s26 = ssub.s32 %s18, %s25
    %p27 = scmp.eq.s32.totalorder %s26, 0
    %s29 = sadd.s32 %s28, 1
    %s30 = scalar_select %p27, %s28, %s29
    %p33 = pneg %p27
    %p34 = scmp.eq.s32.totalorder %s18, 1
    %p35 = por %p33, %p34
    %p36 = scmp.ne.s32.totalorder %s28, %s31
    %p37 = scmp.eq.s32.totalorder %s18, 0
    %p38 = por %p36, %p37
    %p39 = scmp.ne.s32.totalorder %s28, %s31
    %p40 = scmp.eq.s32.totalorder %s23, 1
    %p41 = por %p39, %p40
    %p42 = scmp.ne.s32.totalorder %s31, %s32
    %p43 = scmp.eq.s32.totalorder %s23, 0
    %p44 = por %p42, %p43
    %p45 = scmp.ne.s32.totalorder %s31, %s32
    %p46 = scmp.eq.s32.totalorder %s24, 1
    %p47 = por %p45, %p46
    %p49 = scmp.ne.s32.totalorder %s32, %s48
    %p50 = scmp.eq.s32.totalorder %s24, 0
    %p51 = por %p49, %p50
    %s53 = sadd.s32 %s52, 1
    %p56 = scmp.eq.s32.totalorder %s18, 1
    %p57 = scmp.ne.s32.totalorder %s52, %s54
    %p58 = scmp.eq.s32.totalorder %s18, 0
    %p59 = por %p57, %p58
    %p60 = scmp.ne.s32.totalorder %s52, %s54
    %p61 = scmp.eq.s32.totalorder %s23, 1
    %p62 = por %p60, %p61
    %p63 = scmp.ne.s32.totalorder %s54, %s55
    %p64 = scmp.eq.s32.totalorder %s23, 0
    %p65 = por %p63, %p64
    %p66 = scmp.ne.s32.totalorder %s54, %s55
    %p67 = scmp.eq.s32.totalorder %s24, 1
    %p68 = por %p66, %p67
    %p70 = scmp.ne.s32.totalorder %s55, %s69
    %p71 = scmp.eq.s32.totalorder %s24, 0
    %p72 = por %p70, %p71
    %s74 = sadd.s32 %s73, 1
    %p77 = scmp.eq.s32.totalorder %s18, 1
    %p78 = scmp.ne.s32.totalorder %s73, %s75
    %p79 = scmp.eq.s32.totalorder %s18, 0
    %p80 = por %p78, %p79
    %p81 = scmp.ne.s32.totalorder %s73, %s75
    %p82 = scmp.eq.s32.totalorder %s23, 1
    %p83 = por %p81, %p82
    %p84 = scmp.ne.s32.totalorder %s75, %s76
    %p85 = scmp.eq.s32.totalorder %s23, 0
    %p86 = por %p84, %p85
    %p87 = scmp.ne.s32.totalorder %s75, %s76
    %p88 = scmp.eq.s32.totalorder %s24, 1
    %p89 = por %p87, %p88
    %p91 = scmp.ne.s32.totalorder %s76, %s90
    %p92 = scmp.eq.s32.totalorder %s24, 0
    %p93 = por %p91, %p92
    %s95 = sadd.s32 %s94, 1
    %p98 = scmp.eq.s32.totalorder %s18, 1
    %p99 = scmp.ne.s32.totalorder %s94, %s96
    %p100 = scmp.eq.s32.totalorder %s18, 0
    %p101 = por %p99, %p100
    %p102 = scmp.ne.s32.totalorder %s94, %s96
    %p103 = scmp.eq.s32.totalorder %s23, 1
    %p104 = por %p102, %p103
    %p105 = scmp.ne.s32.totalorder %s96, %s97
    %p106 = scmp.eq.s32.totalorder %s23, 0
    %p107 = por %p105, %p106
    %p108 = scmp.ne.s32.totalorder %s96, %s97
    %p109 = scmp.eq.s32.totalorder %s24, 1
    %p110 = por %p108, %p109
    %p112 = scmp.ne.s32.totalorder %s97, %s111
    %p113 = scmp.eq.s32.totalorder %s24, 0
    %p114 = por %p112, %p113
    %s116 = sadd.s32 %s115, 1
    %p119 = scmp.eq.s32.totalorder %s18, 1
    %p120 = scmp.ne.s32.totalorder %s115, %s117
    %p121 = scmp.eq.s32.totalorder %s18, 0
    %p122 = por %p120, %p121
    %p123 = scmp.ne.s32.totalorder %s115, %s117
    %p124 = scmp.eq.s32.totalorder %s23, 1
    %p125 = por %p123, %p124
    %p126 = scmp.ne.s32.totalorder %s117, %s118
    %p127 = scmp.eq.s32.totalorder %s23, 0
    %p128 = por %p126, %p127
    %p129 = scmp.ne.s32.totalorder %s117, %s118
    %p130 = scmp.eq.s32.totalorder %s24, 1
    %p131 = por %p129, %p130
    %p133 = scmp.ne.s32.totalorder %s118, %s132
    %p134 = scmp.eq.s32.totalorder %s24, 0
    %p135 = por %p133, %p134
    %s137 = sadd.s32 %s136, 1
    %p140 = scmp.eq.s32.totalorder %s18, 1
    %p141 = scmp.ne.s32.totalorder %s136, %s138
    %p142 = scmp.eq.s32.totalorder %s18, 0
    %p143 = por %p141, %p142
    %p144 = scmp.ne.s32.totalorder %s136, %s138
    %p145 = scmp.eq.s32.totalorder %s23, 1
    %p146 = por %p144, %p145
    %p147 = scmp.ne.s32.totalorder %s138, %s139
    %p148 = scmp.eq.s32.totalorder %s23, 0
    %p149 = por %p147, %p148
    %p150 = scmp.ne.s32.totalorder %s138, %s139
    %p151 = scmp.eq.s32.totalorder %s24, 1
    %p152 = por %p150, %p151
    %p154 = scmp.ne.s32.totalorder %s139, %s153
    %p155 = scmp.eq.s32.totalorder %s24, 0
    %p156 = por %p154, %p155
    %s158 = sadd.s32 %s157, 1
    %p161 = scmp.eq.s32.totalorder %s18, 1
    %p162 = scmp.ne.s32.totalorder %s157, %s159
    %p163 = scmp.eq.s32.totalorder %s18, 0
    %p164 = por %p162, %p163
    %p165 = scmp.ne.s32.totalorder %s157, %s159
    %p166 = scmp.eq.s32.totalorder %s23, 1
    %p167 = por %p165, %p166
    %p168 = scmp.ne.s32.totalorder %s159, %s160
    %p169 = scmp.eq.s32.totalorder %s23, 0
    %p170 = por %p168, %p169
    %p171 = scmp.ne.s32.totalorder %s159, %s160
    %p172 = scmp.eq.s32.totalorder %s24, 1
    %p173 = por %p171, %p172
    %p175 = scmp.ne.s32.totalorder %s160, %s174
    %p176 = scmp.eq.s32.totalorder %s24, 0
    %p177 = por %p175, %p176
    %s179 = sadd.s32 %s178, 1
    %p182 = scmp.eq.s32.totalorder %s18, 1
    %p183 = scmp.ne.s32.totalorder %s178, %s180
    %p184 = scmp.eq.s32.totalorder %s18, 0
    %p185 = por %p183, %p184
    %p186 = scmp.ne.s32.totalorder %s178, %s180
    %p187 = scmp.eq.s32.totalorder %s23, 1
    %p188 = por %p186, %p187
    %p189 = scmp.ne.s32.totalorder %s180, %s181
    %p190 = scmp.eq.s32.totalorder %s23, 0
    %p191 = por %p189, %p190
    %p192 = scmp.ne.s32.totalorder %s180, %s181
    %p193 = scmp.eq.s32.totalorder %s24, 1
    %p194 = por %p192, %p193
    %p196 = scmp.ne.s32.totalorder %s181, %s195
    %p197 = scmp.eq.s32.totalorder %s24, 0
    %p198 = por %p196, %p197
    %s200 = sadd.s32 %s199, 1
    %p203 = scmp.eq.s32.totalorder %s18, 1
    %p204 = scmp.ne.s32.totalorder %s199, %s201
    %p205 = scmp.eq.s32.totalorder %s18, 0
    %p206 = por %p204, %p205
    %p207 = scmp.ne.s32.totalorder %s199, %s201
    %p208 = scmp.eq.s32.totalorder %s23, 1
    %p209 = por %p207, %p208
    %p210 = scmp.ne.s32.totalorder %s201, %s202
    %p211 = scmp.eq.s32.totalorder %s23, 0
    %p212 = por %p210, %p211
    %p213 = scmp.ne.s32.totalorder %s201, %s202
    %p214 = scmp.eq.s32.totalorder %s24, 1
    %p215 = por %p213, %p214
    %p217 = scmp.ne.s32.totalorder %s202, %s216
    %p218 = scmp.eq.s32.totalorder %s24, 0
    %p219 = por %p217, %p218
    %s221 = sadd.s32 %s220, 1
    %p224 = scmp.eq.s32.totalorder %s18, 1
    %p225 = scmp.ne.s32.totalorder %s220, %s222
    %p226 = scmp.eq.s32.totalorder %s18, 0
    %p227 = por %p225, %p226
    %p228 = scmp.ne.s32.totalorder %s220, %s222
    %p229 = scmp.eq.s32.totalorder %s23, 1
    %p230 = por %p228, %p229
    %p231 = scmp.ne.s32.totalorder %s222, %s223
    %p232 = scmp.eq.s32.totalorder %s23, 0
    %p233 = por %p231, %p232
    %p234 = scmp.ne.s32.totalorder %s222, %s223
    %p235 = scmp.eq.s32.totalorder %s24, 1
    %p236 = por %p234, %p235
    %p238 = scmp.ne.s32.totalorder %s223, %s237
    %p239 = scmp.eq.s32.totalorder %s24, 0
    %p240 = por %p238, %p239
    %s241 = ssub.s32 %s18, %s25
    %p242 = scmp.eq.s32.totalorder %s241, 0
    %s244 = sadd.s32 %s243, 1
    %s245 = scalar_select %p242, %s243, %s244
    %p248 = pneg %p242
    %p249 = scmp.eq.s32.totalorder %s18, 1
    %p250 = por %p248, %p249
    %p251 = scmp.ne.s32.totalorder %s243, %s246
    %p252 = scmp.eq.s32.totalorder %s18, 0
    %p253 = por %p251, %p252
    %p254 = scmp.ne.s32.totalorder %s243, %s246
    %p255 = scmp.eq.s32.totalorder %s23, 1
    %p256 = por %p254, %p255
    %p257 = scmp.ne.s32.totalorder %s246, %s247
    %p258 = scmp.eq.s32.totalorder %s23, 0
    %p259 = por %p257, %p258
    %p260 = scmp.ne.s32.totalorder %s246, %s247
    %p261 = scmp.eq.s32.totalorder %s24, 1
    %p262 = por %p260, %p261
    %p264 = scmp.ne.s32.totalorder %s247, %s263
    %p265 = scmp.eq.s32.totalorder %s24, 0
    %p266 = por %p264, %p265
    %s267 = ssub.s32 %s18, %s25
    %p268 = scmp.eq.s32.totalorder %s267, 0
    %s270 = sadd.s32 %s269, 1
    %s271 = scalar_select %p268, %s269, %s270
    %p274 = pneg %p268
    %p275 = scmp.eq.s32.totalorder %s18, 1
    %p276 = por %p274, %p275
    %p277 = scmp.ne.s32.totalorder %s269, %s272
    %p278 = scmp.eq.s32.totalorder %s18, 0
    %p279 = por %p277, %p278
    %p280 = scmp.ne.s32.totalorder %s269, %s272
    %p281 = scmp.eq.s32.totalorder %s23, 1
    %p282 = por %p280, %p281
    %p283 = scmp.ne.s32.totalorder %s272, %s273
    %p284 = scmp.eq.s32.totalorder %s23, 0
    %p285 = por %p283, %p284
    %p286 = scmp.ne.s32.totalorder %s272, %s273
    %p287 = scmp.eq.s32.totalorder %s24, 1
    %p288 = por %p286, %p287
    %p290 = scmp.ne.s32.totalorder %s273, %s289
    %p291 = scmp.eq.s32.totalorder %s24, 0
    %p292 = por %p290, %p291
    %s293 = ssub.s32 %s18, %s25
    %p294 = scmp.eq.s32.totalorder %s293, 0
    %s296 = sadd.s32 %s295, 1
    %s297 = scalar_select %p294, %s295, %s296
    %p300 = pneg %p294
    %p301 = scmp.eq.s32.totalorder %s18, 1
    %p302 = por %p300, %p301
    %p303 = scmp.ne.s32.totalorder %s295, %s298
    %p304 = scmp.eq.s32.totalorder %s18, 0
    %p305 = por %p303, %p304
    %p306 = scmp.ne.s32.totalorder %s295, %s298
    %p307 = scmp.eq.s32.totalorder %s23, 1
    %p308 = por %p306, %p307
    %p309 = scmp.ne.s32.totalorder %s298, %s299
    %p310 = scmp.eq.s32.totalorder %s23, 0
    %p311 = por %p309, %p310
    %p312 = scmp.ne.s32.totalorder %s298, %s299
    %p313 = scmp.eq.s32.totalorder %s24, 1
    %p314 = por %p312, %p313
    %p316 = scmp.ne.s32.totalorder %s299, %s315
    %p317 = scmp.eq.s32.totalorder %s24, 0
    %p318 = por %p316, %p317
    %p319 = scmp.le.s32.totalorder 1, %s18
    %p320 = scmp.lt.s32.totalorder %s18, 3
    %p321 = pnand %p319, %p320
    %p322 = pneg %p321
    // Predicated region
    $region9: #{resnet_block_forward.1} parent=5 // pred_check
      _
    $region10: #{resnet_block_forward.1} parent=5 // pred_check_branch
      %324 = sbr.rel (%p321) target = $region12
    $region11: #{resnet_block_forward.1} parent=5 // pred_region
      %s325 = ssub.s32 %s18, 1
      // Predicated region
      $region13: #{resnet_block_forward.1} parent=11 // pred_check
        %p326 = pneg %p65
      $region14: #{resnet_block_forward.1} parent=11 // pred_check_branch
        %328 = sbr.rel (%p326) target = $region16
      $region15: #{resnet_block_forward.1} parent=11 // pred_region
        _
      $region16: #{resnet_block_forward.1} parent=11 // pred_fallthru
        _
      // Predicated region
      $region17: #{resnet_block_forward.1} parent=11 // pred_check
        %p329 = pneg %p86
      $region18: #{resnet_block_forward.1} parent=11 // pred_check_branch
        %331 = sbr.rel (%p329) target = $region20
      $region19: #{resnet_block_forward.1} parent=11 // pred_region
        _
      $region20: #{resnet_block_forward.1} parent=11 // pred_fallthru
        _
      // Predicated region
      $region21: #{resnet_block_forward.1} parent=11 // pred_check
        %p332 = pneg %p107
      $region22: #{resnet_block_forward.1} parent=11 // pred_check_branch
        %334 = sbr.rel (%p332) target = $region24
      $region23: #{resnet_block_forward.1} parent=11 // pred_region
        _
      $region24: #{resnet_block_forward.1} parent=11 // pred_fallthru
        _
      // Predicated region
      $region25: #{resnet_block_forward.1} parent=11 // pred_check
        %p335 = pneg %p128
      $region26: #{resnet_block_forward.1} parent=11 // pred_check_branch
        %337 = sbr.rel (%p335) target = $region28
      $region27: #{resnet_block_forward.1} parent=11 // pred_region
        _
      $region28: #{resnet_block_forward.1} parent=11 // pred_fallthru
        _
      // Predicated region
      $region29: #{resnet_block_forward.1} parent=11 // pred_check
        %p338 = pneg %p149
      $region30: #{resnet_block_forward.1} parent=11 // pred_check_branch
        %340 = sbr.rel (%p338) target = $region32
      $region31: #{resnet_block_forward.1} parent=11 // pred_region
        _
      $region32: #{resnet_block_forward.1} parent=11 // pred_fallthru
        _
      // Predicated region
      $region33: #{resnet_block_forward.1} parent=11 // pred_check
        %p341 = pneg %p170
      $region34: #{resnet_block_forward.1} parent=11 // pred_check_branch
        %343 = sbr.rel (%p341) target = $region36
      $region35: #{resnet_block_forward.1} parent=11 // pred_region
        _
      $region36: #{resnet_block_forward.1} parent=11 // pred_fallthru
        _
      // Predicated region
      $region37: #{resnet_block_forward.1} parent=11 // pred_check
        %p344 = pneg %p191
      $region38: #{resnet_block_forward.1} parent=11 // pred_check_branch
        %346 = sbr.rel (%p344) target = $region40
      $region39: #{resnet_block_forward.1} parent=11 // pred_region
        _
      $region40: #{resnet_block_forward.1} parent=11 // pred_fallthru
        _
      // Predicated region
      $region41: #{resnet_block_forward.1} parent=11 // pred_check
        %p347 = pneg %p212
      $region42: #{resnet_block_forward.1} parent=11 // pred_check_branch
        %349 = sbr.rel (%p347) target = $region44
      $region43: #{resnet_block_forward.1} parent=11 // pred_region
        _
      $region44: #{resnet_block_forward.1} parent=11 // pred_fallthru
        _
      // Predicated region
      $region45: #{resnet_block_forward.1} parent=11 // pred_check
        %p350 = pneg %p233
      $region46: #{resnet_block_forward.1} parent=11 // pred_check_branch
        %352 = sbr.rel (%p350) target = $region48
      $region47: #{resnet_block_forward.1} parent=11 // pred_region
        _
      $region48: #{resnet_block_forward.1} parent=11 // pred_fallthru
        _
    $region12: #{resnet_block_forward.1} parent=5 // pred_fallthru
      _
    %p353 = scmp.lt.s32.totalorder %s18, 2
    // Predicated region
    $region49: #{resnet_block_forward.1} parent=5 // pred_check
      %p354 = pneg %p353
    $region50: #{resnet_block_forward.1} parent=5 // pred_check_branch
      %356 = sbr.rel (%p354) target = $region52
    $region51: #{resnet_block_forward.1} parent=5 // pred_region
      // Predicated region
      $region53: #{resnet_block_forward.1} parent=51 // pred_check
        %p357 = pneg %p38
      $region54: #{resnet_block_forward.1} parent=51 // pred_check_branch
        %359 = sbr.rel (%p357) target = $region56
      $region55: #{resnet_block_forward.1} parent=51 // pred_region
        %p360 = scmp.lt.s32.totalorder %s18, 1
        %s361 = scalar_select %p360, %s18, 1
        %s362 = smul.addr %s361, 3
        %s363 = smul.addr %s362, 4
        %s364 = scalar_lea.vmem %s0, %s363
      $region56: #{resnet_block_forward.1} parent=51 // pred_fallthru
        _
      // Predicated region
      $region57: #{resnet_block_forward.1} parent=51 // pred_check
        %p365 = pneg %p253
      $region58: #{resnet_block_forward.1} parent=51 // pred_check_branch
        %367 = sbr.rel (%p365) target = $region60
      $region59: #{resnet_block_forward.1} parent=51 // pred_region
        %p368 = scmp.lt.s32.totalorder %s18, 1
        %s369 = scalar_select %p368, %s18, 1
        %s370 = smul.addr %s369, 8
        %s371 = scalar_lea.vmem %s10, %s370
      $region60: #{resnet_block_forward.1} parent=51 // pred_fallthru
        _
      // Predicated region
      $region61: #{resnet_block_forward.1} parent=51 // pred_check
        %p372 = pneg %p279
      $region62: #{resnet_block_forward.1} parent=51 // pred_check_branch
        %374 = sbr.rel (%p372) target = $region64
      $region63: #{resnet_block_forward.1} parent=51 // pred_region
        %p375 = scmp.lt.s32.totalorder %s18, 1
        %s376 = scalar_select %p375, %s18, 1
        %s377 = smul.addr %s376, 8
        %s378 = scalar_lea.vmem %s11, %s377
      $region64: #{resnet_block_forward.1} parent=51 // pred_fallthru
        _
    $region52: #{resnet_block_forward.1} parent=5 // pred_fallthru
      _
    %p379 = scmp.le.s32.totalorder 1, %s18
    %p380 = scmp.lt.s32.totalorder %s18, 3
    %p381 = pnand %p379, %p380
    %p382 = pneg %p381
    // Predicated region
    $region65: #{resnet_block_forward.1} parent=5 // pred_check
      _
    $region66: #{resnet_block_forward.1} parent=5 // pred_check_branch
      %384 = sbr.rel (%p381) target = $region68
    $region67: #{resnet_block_forward.1} parent=5 // pred_region
      %s385 = ssub.s32 %s18, 1
      %p386 = scmp.lt.s32.totalorder %s23, 1
      %s387 = scalar_select %p386, %s23, 1
      %s388 = smul.addr %s387, 3
      %s389 = smul.addr %s388, 4
      %s390 = scalar_lea.vmem %s0, %s389
      %p391 = pneg %p44
      %p392 = pneg %p41
      %p393 = pneg %p65
      %p394 = pneg %p62
      %p395 = pneg %p86
      %p396 = pneg %p83
      %p397 = pneg %p107
      %p398 = pneg %p104
      %p399 = pneg %p128
      %p400 = pneg %p125
      %p401 = pneg %p149
      %p402 = pneg %p146
      %p403 = pneg %p170
      %p404 = pneg %p167
      %p405 = pneg %p191
      %p406 = pneg %p188
      %p407 = pneg %p212
      %p408 = pneg %p209
      %p409 = pneg %p233
      %p410 = pneg %p230
      %p411 = scmp.lt.s32.totalorder %s23, 1
      %s412 = scalar_select %p411, %s23, 1
      %s413 = smul.addr %s412, 8
      %s414 = scalar_lea.vmem %s10, %s413
      %p415 = pneg %p259
      %p416 = pneg %p256
      %p417 = scmp.lt.s32.totalorder %s23, 1
      %s418 = scalar_select %p417, %s23, 1
      %s419 = smul.addr %s418, 8
      %s420 = scalar_lea.vmem %s11, %s419
      %p421 = pneg %p285
      %p422 = pneg %p282
      %p423 = pneg %p311
      %p424 = pneg %p308
      %p425 = scmp.lt.s32.totalorder %s23, 1
      %s426 = scalar_select %p425, %s23, 1
      %s427 = smul.addr %s426, 3
      %s428 = smul.addr %s427, 8
      %s429 = scalar_lea.vmem %s12, %s428
      %p430 = scmp.lt.s32.totalorder %s23, 1
      %s431 = scalar_select %p430, %s23, 1
      %s432 = smul.addr %s431, 3
      %s433 = smul.addr %s432, 4
      %s434 = scalar_lea.vmem %s0, %s433
      %p435 = scmp.lt.s32.totalorder %s23, 1
      %s436 = scalar_select %p435, %s23, 1
      %s437 = smul.addr %s436, 8
      %s438 = scalar_lea.vmem %s10, %s437
      %p439 = scmp.lt.s32.totalorder %s23, 1
      %s440 = scalar_select %p439, %s23, 1
      %s441 = smul.addr %s440, 8
      %s442 = scalar_lea.vmem %s11, %s441
      %p443 = scmp.lt.s32.totalorder %s23, 1
      %s444 = scalar_select %p443, %s23, 1
      %s445 = smul.addr %s444, 3
      %s446 = smul.addr %s445, 8
      %s447 = scalar_lea.vmem %s12, %s446
      %v448 = vld [vmem:[%s434] sm:$0xff]
      %v449 = vld [vmem:[%s434 + $0x8] sm:$0xf]
      %452 = vst [vmem:[#allocation1] ss:$2 sm:$0xff] %v448
      %s453 = scalar_lea.vmem [#allocation1], 16
      %454 = vst [vmem:[%s453] ss:$2 sm:$0xff] %v449
      %v455 = vld.sshfl [vmem:[#allocation1] sm:$0xff pattern:$0x75316420]
      %v456 = vld.sshfl [vmem:[#allocation1 + $0x8] sm:$0xff pattern:$0x75316420]
      %v457 = vld.sshfl [vmem:[#allocation1 + $0x10] sm:$0xff pattern:$0x75316420]
      %461 = vst [vmem:[#allocation2] sm:$0xf] %v455
      %462 = vst [vmem:[#allocation2 + $0x8] sm:$0xf] %v456
      %vm463 = vcmask 551936
      %464 = vst.msk [vmem:[#allocation2 + $0x10] sm:$0xf] %vm463, %v457
      %v465 = vld [vmem:[%s434] sm:$0xff]
      %v466 = vld [vmem:[%s434 + $0x8] sm:$0xf]
      %s469 = scalar_lea.vmem [#allocation1], 1
      %470 = vst [vmem:[%s469] ss:$2 sm:$0xff] %v465
      %s471 = scalar_lea.vmem [#allocation1], 17
      %472 = vst [vmem:[%s471] ss:$2 sm:$0xff] %v466
      %v473 = vld.sshfl [vmem:[#allocation1] sm:$0xff pattern:$0x75316420]
      %v474 = vld.sshfl [vmem:[#allocation1 + $0x8] sm:$0xff pattern:$0x75316420]
      %v475 = vld.sshfl [vmem:[#allocation1 + $0x10] sm:$0xff pattern:$0x75316420]
      %476 = vrot.lane.b32.xlu0 %v473, 127
      %v477 = vpop.permute.xlu0 %476
      %478 = vrot.lane.b32.xlu0 %v474, 127
      %v479 = vpop.permute.xlu0 %478
      %480 = vrot.lane.b32.xlu0 %v475, 127
      %v481 = vpop.permute.xlu0 %480
      %vm482 = vcmask 1039360
      %v483 = vsel %vm482, %v477, %v479
      %v484 = vsel %vm482, %v479, %v481
      %488 = vst [vmem:[#allocation2] sm:$0xf0] %v483
      %489 = vst [vmem:[#allocation2 + $0x8] sm:$0xf0] %v484
      %vm490 = vcmask 556036
      %491 = vst.msk [vmem:[#allocation2 + $0x10] sm:$0xf0] %vm490, %v481
      %v492 = vld [vmem:[%s434] sm:$0xff]
      %v493 = vld [vmem:[%s434 + $0x8] sm:$0xf]
      %496 = vst [vmem:[#allocation1] ss:$2 sm:$0xff] %v492
      %s497 = scalar_lea.vmem [#allocation1], 16
      %498 = vst [vmem:[%s497] ss:$2 sm:$0xff] %v493
      %v499 = vld.sshfl [vmem:[#allocation1] sm:$0xff pattern:$0x75316420]
      %v500 = vld.sshfl [vmem:[#allocation1 + $0x8] sm:$0xff pattern:$0x75316420]
      %v501 = vld.sshfl [vmem:[#allocation1 + $0x10] sm:$0xff pattern:$0x75316420]
      %502 = vrot.lane.b32.xlu0 %v499, 126
      %v503 = vpop.permute.xlu0 %502
      %504 = vrot.lane.b32.xlu0 %v500, 126
      %v505 = vpop.permute.xlu0 %504
      %506 = vrot.lane.b32.xlu0 %v501, 126
      %v507 = vpop.permute.xlu0 %506
      %vm508 = vcmask 1031168
      %v509 = vsel %vm508, %v503, %v505
      %v510 = vsel %vm508, %v505, %v507
      %514 = vst [vmem:[#allocation2 + $0x18] sm:$0xf] %v509
      %515 = vst [vmem:[#allocation2 + $0x20] sm:$0xf] %v510
      %516 = vst.msk [vmem:[#allocation2 + $0x28] sm:$0xf] %vm463, %v507
      %v517 = vld [vmem:[%s434] sm:$0xff]
      %v518 = vld [vmem:[%s434 + $0x8] sm:$0xf]
      %s521 = scalar_lea.vmem [#allocation1], 1
      %522 = vst [vmem:[%s521] ss:$2 sm:$0xff] %v517
      %s523 = scalar_lea.vmem [#allocation1], 17
      %524 = vst [vmem:[%s523] ss:$2 sm:$0xff] %v518
      %v525 = vld.sshfl [vmem:[#allocation1] sm:$0xff pattern:$0x75316420]
      %v526 = vld.sshfl [vmem:[#allocation1 + $0x8] sm:$0xff pattern:$0x75316420]
      %v527 = vld.sshfl [vmem:[#allocation1 + $0x10] sm:$0xff pattern:$0x75316420]
      %528 = vrot.lane.b32.xlu0 %v525, 110
      %v529 = vpop.permute.xlu0 %528
      %530 = vrot.lane.b32.xlu0 %v526, 110
      %v531 = vpop.permute.xlu0 %530
      %532 = vrot.lane.b32.xlu0 %v527, 110
      %v533 = vpop.permute.xlu0 %532
      %vm534 = vcmask 900096
      %v535 = vsel %vm534, %v529, %v531
      %v536 = vsel %vm534, %v531, %v533
      %540 = vst [vmem:[#allocation2 + $0x18] sm:$0xf0] %v535
      %541 = vst [vmem:[#allocation2 + $0x20] sm:$0xf0] %v536
      %542 = vst.msk [vmem:[#allocation2 + $0x28] sm:$0xf0] %vm490, %v533
      %v543 = vld [vmem:[%s434] sm:$0xff]
      %v544 = vld [vmem:[%s434 + $0x8] sm:$0xf]
      %547 = vst [vmem:[#allocation1] ss:$2 sm:$0xff] %v543
      %s548 = scalar_lea.vmem [#allocation1], 16
      %549 = vst [vmem:[%s548] ss:$2 sm:$0xff] %v544
      %v550 = vld.sshfl [vmem:[#allocation1] sm:$0xff pattern:$0x75316420]
      %v551 = vld.sshfl [vmem:[#allocation1 + $0x8] sm:$0xff pattern:$0x75316420]
      %v552 = vld.sshfl [vmem:[#allocation1 + $0x10] sm:$0xff pattern:$0x75316420]
      %553 = vrot.lane.b32.xlu0 %v550, 109
      %v554 = vpop.permute.xlu0 %553
      %555 = vrot.lane.b32.xlu0 %v551, 109
      %v556 = vpop.permute.xlu0 %555
      %557 = vrot.lane.b32.xlu0 %v552, 109
      %v558 = vpop.permute.xlu0 %557
      %vm559 = vcmask 891904
      %v560 = vsel %vm559, %v554, %v556
      %v561 = vsel %vm559, %v556, %v558
      %565 = vst [vmem:[#allocation2 + $0x30] sm:$0xf] %v560
      %566 = vst [vmem:[#allocation2 + $0x38] sm:$0xf] %v561
      %567 = vst.msk [vmem:[#allocation2 + $0x40] sm:$0xf] %vm463, %v558
      %v568 = vld [vmem:[%s434] sm:$0xff]
      %v569 = vld [vmem:[%s434 + $0x8] sm:$0xf]
      %s572 = scalar_lea.vmem [#allocation1], 1
      %573 = vst [vmem:[%s572] ss:$2 sm:$0xff] %v568
      %s574 = scalar_lea.vmem [#allocation1], 17
      %575 = vst [vmem:[%s574] ss:$2 sm:$0xff] %v569
      %v576 = vld.sshfl [vmem:[#allocation1] sm:$0xff pattern:$0x75316420]
      %v577 = vld.sshfl [vmem:[#allocation1 + $0x8] sm:$0xff pattern:$0x75316420]
      %v578 = vld.sshfl [vmem:[#allocation1 + $0x10] sm:$0xff pattern:$0x75316420]
      %579 = vrot.lane.b32.xlu0 %v576, 108
      %v580 = vpop.permute.xlu0 %579
      %581 = vrot.lane.b32.xlu0 %v577, 108
      %v582 = vpop.permute.xlu0 %581
      %583 = vrot.lane.b32.xlu0 %v578, 108
      %v584 = vpop.permute.xlu0 %583
      %vm585 = vcmask 883712
      %v586 = vsel %vm585, %v580, %v582
      %v587 = vsel %vm585, %v582, %v584
      %591 = vst [vmem:[#allocation2 + $0x30] sm:$0xf0] %v586
      %592 = vst [vmem:[#allocation2 + $0x38] sm:$0xf0] %v587
      %593 = vst.msk [vmem:[#allocation2 + $0x40] sm:$0xf0] %vm490, %v584
      %v594 = vld [vmem:[%s434] sm:$0xff]
      %v595 = vld [vmem:[%s434 + $0x8] sm:$0xf]
      %598 = vst [vmem:[#allocation1] ss:$2 sm:$0xff] %v594
      %s599 = scalar_lea.vmem [#allocation1], 16
      %600 = vst [vmem:[%s599] ss:$2 sm:$0xff] %v595
      %v601 = vld.sshfl [vmem:[#allocation1] sm:$0xff pattern:$0x75316420]
      %v602 = vld.sshfl [vmem:[#allocation1 + $0x8] sm:$0xff pattern:$0x75316420]
      %v603 = vld.sshfl [vmem:[#allocation1 + $0x10] sm:$0xff pattern:$0x75316420]
      %604 = vrot.lane.b32.xlu0 %v601, 92
      %v605 = vpop.permute.xlu0 %604
      %606 = vrot.lane.b32.xlu0 %v602, 92
      %v607 = vpop.permute.xlu0 %606
      %608 = vrot.lane.b32.xlu0 %v603, 92
      %v609 = vpop.permute.xlu0 %608
      %vm610 = vcmask 752640
      %v611 = vsel %vm610, %v605, %v607
      %v612 = vsel %vm610, %v607, %v609
      %616 = vst [vmem:[#allocation2 + $0x48] sm:$0xf] %v611
      %617 = vst [vmem:[#allocation2 + $0x50] sm:$0xf] %v612
      %618 = vst.msk [vmem:[#allocation2 + $0x58] sm:$0xf] %vm463, %v609
      %v619 = vld [vmem:[%s434] sm:$0xff]
      %v620 = vld [vmem:[%s434 + $0x8] sm:$0xf]
      %s623 = scalar_lea.vmem [#allocation1], 1
      %624 = vst [vmem:[%s623] ss:$2 sm:$0xff] %v619
      %s625 = scalar_lea.vmem [#allocation1], 17
      %626 = vst [vmem:[%s625] ss:$2 sm:$0xff] %v620
      %v627 = vld.sshfl [vmem:[#allocation1] sm:$0xff pattern:$0x75316420]
      %v628 = vld.sshfl [vmem:[#allocation1 + $0x8] sm:$0xff pattern:$0x75316420]
      %v629 = vld.sshfl [vmem:[#allocation1 + $0x10] sm:$0xff pattern:$0x75316420]
      %630 = vrot.lane.b32.xlu0 %v627, 91
      %v631 = vpop.permute.xlu0 %630
      %632 = vrot.lane.b32.xlu0 %v628, 91
      %v633 = vpop.permute.xlu0 %632
      %634 = vrot.lane.b32.xlu0 %v629, 91
      %v635 = vpop.permute.xlu0 %634
      %vm636 = vcmask 744448
      %v637 = vsel %vm636, %v631, %v633
      %v638 = vsel %vm636, %v633, %v635
      %642 = vst [vmem:[#allocation2 + $0x48] sm:$0xf0] %v637
      %643 = vst [vmem:[#allocation2 + $0x50] sm:$0xf0] %v638
      %644 = vst.msk [vmem:[#allocation2 + $0x58] sm:$0xf0] %vm490, %v635
      %v645 = vld [vmem:[%s434] sm:$0xff]
      %v646 = vld [vmem:[%s434 + $0x8] sm:$0xf]
      %649 = vst [vmem:[#allocation1] ss:$2 sm:$0xff] %v645
      %s650 = scalar_lea.vmem [#allocation1], 16
      %651 = vst [vmem:[%s650] ss:$2 sm:$0xff] %v646
      %v652 = vld.sshfl [vmem:[#allocation1] sm:$0xff pattern:$0x75316420]
      %v653 = vld.sshfl [vmem:[#allocation1 + $0x8] sm:$0xff pattern:$0x75316420]
      %v654 = vld.sshfl [vmem:[#allocation1 + $0x10] sm:$0xff pattern:$0x75316420]
      %655 = vrot.lane.b32.xlu0 %v652, 90
      %v656 = vpop.permute.xlu0 %655
      %657 = vrot.lane.b32.xlu0 %v653, 90
      %v658 = vpop.permute.xlu0 %657
      %659 = vrot.lane.b32.xlu0 %v654, 90
      %v660 = vpop.permute.xlu0 %659
      %vm661 = vcmask 736256
      %v662 = vsel %vm661, %v656, %v658
      %v663 = vsel %vm661, %v658, %v660
      %667 = vst [vmem:[#allocation2 + $0x60] sm:$0xf] %v662
      %668 = vst [vmem:[#allocation2 + $0x68] sm:$0xf] %v663
      %669 = vst.msk [vmem:[#allocation2 + $0x70] sm:$0xf] %vm463, %v660
      %v670 = vld [vmem:[%s2] sm:$0xff]
      %v671 = vld [vmem:[#allocation2] sm:$0xff]
      %v672 = vld [vmem:[#allocation2 + $0x8] sm:$0xff]
      %v673 = vld [vmem:[#allocation2 + $0x10] sm:$0xff]
      %v674 = vld [vmem:[#allocation2 + $0x18] sm:$0xff]
      %v675 = vld [vmem:[#allocation2 + $0x20] sm:$0xff]
      %v676 = vld [vmem:[#allocation2 + $0x28] sm:$0xff]
      %v677 = vld [vmem:[#allocation2 + $0x30] sm:$0xff]
      %v678 = vld [vmem:[#allocation2 + $0x38] sm:$0xff]
      %v679 = vld [vmem:[#allocation2 + $0x40] sm:$0xff]
      %v680 = vld [vmem:[#allocation2 + $0x48] sm:$0xff]
      %v681 = vld [vmem:[#allocation2 + $0x50] sm:$0xff]
      %v682 = vld [vmem:[#allocation2 + $0x58] sm:$0xff]
      %v683 = vld [vmem:[#allocation2 + $0x60] sm:$0xf]
      %v684 = vld [vmem:[#allocation2 + $0x68] sm:$0xf]
      %v685 = vld [vmem:[#allocation2 + $0x70] sm:$0xf]
      %v686 = vld [vmem:[%s3] sm:$0xff]
      %688 = vset.pattern.permute.xlu0 0
      %689 = vperm.xlu0 %688, %v686
      %v690 = vpop.permute.xlu0 %689
      %vm692 = vcmask 293888
      %v694 = vsel %vm692, %v670, 0
      %vm696 = vcmask 1043456
      %v698 = vsel %vm696, %v683, 0
      %v701 = vsel %vm696, %v684, 0
      %v704 = vsel %vm696, %v685, 0
      %706 = vmatpush.msra.mxu0 0.0
      %707 = vmatpush.msra.mxu0 0.0
      %708 = vmatpush.msra.mxu0 0.0
      %709 = vmatpush.msra.mxu0 0.0
      %710 = vmatpush.msra.mxu0 0.0
      %711 = vmatpush.msra.mxu0 0.0
      %712 = vmatpush.msra.mxu0 0.0
      %713 = vmatpush.msra.mxu0 0.0
      %714 = vmatpush.msra.mxu0 0.0
      %715 = vmatpush.msra.mxu0 0.0
      %716 = vmatpush.msra.mxu0 0.0
      %717 = vmatpush.msra.mxu0 %v698
      %718 = vmatpush.msra.mxu0 %v680
      %719 = vmatpush.msra.mxu0 %v677
      %720 = vmatpush.msra.mxu0 %v674
      %721 = vmatpush.msra.mxu0 %v671
      %722 = vmatmul.f32.gmra.mxu0 %v694
      %v723 = vpop.f32.mrf.mxu0
      %v724 = vadd.f32 %v690, %v723
      %725 = vdwg.mxu0
      %726 = vmatpush.msra.mxu0 0.0
      %727 = vmatpush.msra.mxu0 0.0
      %728 = vmatpush.msra.mxu0 0.0
      %729 = vmatpush.msra.mxu0 0.0
      %730 = vmatpush.msra.mxu0 0.0
      %731 = vmatpush.msra.mxu0 0.0
      %732 = vmatpush.msra.mxu0 0.0
      %733 = vmatpush.msra.mxu0 0.0
      %734 = vmatpush.msra.mxu0 0.0
      %735 = vmatpush.msra.mxu0 0.0
      %736 = vmatpush.msra.mxu0 0.0
      %737 = vmatpush.msra.mxu0 %v701
      %738 = vmatpush.msra.mxu0 %v681
      %739 = vmatpush.msra.mxu0 %v678
      %740 = vmatpush.msra.mxu0 %v675
      %741 = vmatpush.msra.mxu0 %v672
      %742 = vmatmul.f32.gmra.mxu0 %v694
      %v743 = vpop.f32.mrf.mxu0
      %v744 = vadd.f32 %v690, %v743
      %745 = vdwg.mxu0
      %746 = vmatpush.msra.mxu0 0.0
      %747 = vmatpush.msra.mxu0 0.0
      %748 = vmatpush.msra.mxu0 0.0
      %749 = vmatpush.msra.mxu0 0.0
      %750 = vmatpush.msra.mxu0 0.0
      %751 = vmatpush.msra.mxu0 0.0
      %752 = vmatpush.msra.mxu0 0.0
      %753 = vmatpush.msra.mxu0 0.0
      %754 = vmatpush.msra.mxu0 0.0
      %755 = vmatpush.msra.mxu0 0.0
      %756 = vmatpush.msra.mxu0 0.0
      %757 = vmatpush.msra.mxu0 %v704
      %758 = vmatpush.msra.mxu0 %v682
      %759 = vmatpush.msra.mxu0 %v679
      %760 = vmatpush.msra.mxu0 %v676
      %761 = vmatpush.msra.mxu0 %v673
      %762 = vmatmul.f32.gmra.mxu0 %v694
      %v763 = vpop.f32.mrf.mxu0
      %v764 = vadd.f32 %v690, %v763
      %765 = vdwg.mxu0
      %v766 = vmul.f32 %v724, %v724
      %v767 = vmul.f32 %v744, %v744
      %v768 = vmul.f32 %v764, %v764
      %v769 = vrot.slane %v766, 4
      %v770 = vadd.f32 %v766, %v769
      %v771 = vrot.slane %v770, 2
      %v772 = vadd.f32 %v770, %v771
      %v773 = vrot.slane %v772, 1
      %v774 = vadd.f32 %v772, %v773
      %v775 = vrot.slane %v767, 4
      %v776 = vadd.f32 %v767, %v775
      %v777 = vrot.slane %v776, 2
      %v778 = vadd.f32 %v776, %v777
      %v779 = vrot.slane %v778, 1
      %v780 = vadd.f32 %v778, %v779
      %vm781 = vcmask 556032
      %v782 = vsel %vm781, %v768, 0.0
      %v783 = vrot.slane %v782, 4
      %v784 = vadd.f32 %v782, %v783
      %v785 = vrot.slane %v784, 2
      %v786 = vadd.f32 %v784, %v785
      %v787 = vrot.slane %v786, 1
      %v788 = vadd.f32 %v786, %v787
      %v789 = vmax.f32 %v774, 1e-24
      %v790 = vmax.f32 %v780, 1e-24
      %v791 = vmax.f32 %v788, 1e-24
      %v792 = vrsqrt.pop %v789
      %v793 = vmul.f32 %v792, %v789
      %v794 = vmul.f32 %v793, %v792
      %v795 = vmul.f32 0.5, %v794
      %v796 = vsub.f32 1.5, %v795
      %v797 = vmul.f32 %v792, %v796
      %vm798 = vweird.f32 %v789
      %vm799 = vweird.f32 %v792
      %vm800 = vmor %vm798, %vm799
      %v801 = vsel %vm800, %v792, %v797
      %v802 = vrsqrt.pop %v790
      %v803 = vmul.f32 %v802, %v790
      %v804 = vmul.f32 %v803, %v802
      %v805 = vmul.f32 0.5, %v804
      %v806 = vsub.f32 1.5, %v805
      %v807 = vmul.f32 %v802, %v806
      %vm808 = vweird.f32 %v790
      %vm809 = vweird.f32 %v802
      %vm810 = vmor %vm808, %vm809
      %v811 = vsel %vm810, %v802, %v807
      %v812 = vrsqrt.pop %v791
      %v813 = vmul.f32 %v812, %v791
      %v814 = vmul.f32 %v813, %v812
      %v815 = vmul.f32 0.5, %v814
      %v816 = vsub.f32 1.5, %v815
      %v817 = vmul.f32 %v812, %v816
      %vm818 = vweird.f32 %v791
      %vm819 = vweird.f32 %v812
      %vm820 = vmor %vm818, %vm819
      %v821 = vsel %vm820, %v812, %v817
      %v822 = vmul.f32 %v724, %v801
      %v823 = vmul.f32 %v744, %v811
      %v824 = vmul.f32 %v764, %v821
      %v825 = vld [vmem:[%s4] sm:$0xff]
      %827 = vset.pattern.permute.xlu0 0
      %828 = vperm.xlu0 %827, %v825
      %v829 = vpop.permute.xlu0 %828
      %v831 = vmul.f32 %v822, %v829
      %v832 = vmul.f32 %v823, %v829
      %v833 = vmul.f32 %v824, %v829
      %v834 = vld [vmem:[%s438] sm:$0xff]
      %836 = vset.pattern.permute.xlu0 0
      %837 = vperm.xlu0 %836, %v834
      %v838 = vpop.permute.xlu0 %837
      %v840 = vmul.f32 %v831, %v838
      %v841 = vmul.f32 %v832, %v838
      %v842 = vmul.f32 %v833, %v838
      %v843 = vld [vmem:[%s442] sm:$0xff]
      %845 = vset.pattern.permute.xlu0 0
      %846 = vperm.xlu0 %845, %v843
      %v847 = vpop.permute.xlu0 %846
      %v849 = vadd.f32 %v840, %v847
      %v850 = vadd.f32 %v841, %v847
      %v851 = vadd.f32 %v842, %v847
      %v852 = vxor.u32 %v849, 2147483648
      %v853 = vxor.u32 %v850, 2147483648
      %v854 = vxor.u32 %v851, 2147483648
      %v855 = vmul.f32 %v852, 1.442695
      %v856 = vpow.pop %v855
      %v857 = vmul.f32 %v853, 1.442695
      %v858 = vpow.pop %v857
      %v859 = vmul.f32 %v854, 1.442695
      %v860 = vpow.pop %v859
      %v861 = vadd.f32 %v856, 1.0
      %v862 = vadd.f32 %v858, 1.0
      %v863 = vadd.f32 %v860, 1.0
      %v864 = vrcp.pop %v861
      %v865 = vmul.f32 %v861, %v864
      %v866 = vsub.f32 1.0, %v865
      %v867 = vmul.f32 %v864, %v866
      %v868 = vadd.f32 %v864, %v867
      %vm869 = vweird.f32 %v861
      %vm870 = vweird.f32 %v864
      %vm871 = vmor %vm869, %vm870
      %v872 = vsel %vm871, %v864, %v868
      %v873 = vand.u32 2147483647, %v861
      %vm874 = vcmp.eq.f32.partialorder %v873, 8.507059e+37
      %v875 = vand.u32 %v861, 2147483648
      %v876 = vor.u32 1.1754944e-38, %v875
      %v877 = vsel %vm874, %v876, %v872
      %v878 = vmul.f32 1.0, %v877
      %v879 = vrcp.pop %v862
      %v880 = vmul.f32 %v862, %v879
      %v881 = vsub.f32 1.0, %v880
      %v882 = vmul.f32 %v879, %v881
      %v883 = vadd.f32 %v879, %v882
      %vm884 = vweird.f32 %v862
      %vm885 = vweird.f32 %v879
      %vm886 = vmor %vm884, %vm885
      %v887 = vsel %vm886, %v879, %v883
      %v888 = vand.u32 2147483647, %v862
      %vm889 = vcmp.eq.f32.partialorder %v888, 8.507059e+37
      %v890 = vand.u32 %v862, 2147483648
      %v891 = vor.u32 1.1754944e-38, %v890
      %v892 = vsel %vm889, %v891, %v887
      %v893 = vmul.f32 1.0, %v892
      %v894 = vrcp.pop %v863
      %v895 = vmul.f32 %v863, %v894
      %v896 = vsub.f32 1.0, %v895
      %v897 = vmul.f32 %v894, %v896
      %v898 = vadd.f32 %v894, %v897
      %vm899 = vweird.f32 %v863
      %vm900 = vweird.f32 %v894
      %vm901 = vmor %vm899, %vm900
      %v902 = vsel %vm901, %v894, %v898
      %v903 = vand.u32 2147483647, %v863
      %vm904 = vcmp.eq.f32.partialorder %v903, 8.507059e+37
      %v905 = vand.u32 %v863, 2147483648
      %v906 = vor.u32 1.1754944e-38, %v905
      %v907 = vsel %vm904, %v906, %v902
      %v908 = vmul.f32 1.0, %v907
      %v909 = vmul.f32 %v849, %v878
      %v910 = vmul.f32 %v850, %v893
      %v911 = vmul.f32 %v851, %v908
      %vm912 = vcmask 154624
      %913 = vst.msk [vmem:[#allocation4] sm:$0xff] %vm912, 0.0
      %vm914 = vcmask 868024
      %915 = vst.msk [vmem:[#allocation4 + $0x10] sm:$0xff] %vm914, 0.0
      %v916 = vld [vmem:[%s1] sm:$0x7]
      %v918 = vperm.slane %v916, 0
      %v919 = vperm.slane %v916, 1
      %v920 = vperm.slane %v916, 2
      %v924 = vmul.f32 %v909, %v918
      %v925 = vmul.f32 %v910, %v919
      %v926 = vmul.f32 %v911, %v920
      %930 = vrot.lane.b32.xlu0 %v924, 19
      %v931 = vpop.permute.xlu0 %930
      %932 = vrot.lane.b32.xlu0 %v925, 19
      %v933 = vpop.permute.xlu0 %932
      %934 = vrot.lane.b32.xlu0 %v926, 19
      %v935 = vpop.permute.xlu0 %934
      %v936 = vsel %vm912, %v931, %v933
      %v937 = vsel %vm912, %v933, %v935
      %vm941 = vcmask 1047704
      %942 = vst.msk [vmem:[#allocation4] sm:$0xff] %vm941, %v931
      %943 = vst [vmem:[#allocation4 + $0x8] sm:$0xff] %v936
      %vm944 = vcmask 711680
      %945 = vst.msk [vmem:[#allocation4 + $0x10] sm:$0xff] %vm944, %v937
      %v946 = vld [vmem:[#allocation4] sm:$0xff]
      %v947 = vld [vmem:[#allocation4 + $0x8] sm:$0xff]
      %v948 = vld [vmem:[#allocation4 + $0x10] sm:$0xff]
      %949 = vst [vmem:[#allocation3] sm:$0xff] %v946
      %950 = vst [vmem:[#allocation3 + $0x8] sm:$0xff] %v947
      %951 = vst.msk [vmem:[#allocation3 + $0x10] sm:$0xff] %vm781, %v948
      %v952 = vld [vmem:[#allocation4] sm:$0xff]
      %v953 = vld [vmem:[#allocation4 + $0x8] sm:$0xff]
      %v954 = vld [vmem:[#allocation4 + $0x10] sm:$0xff]
      %958 = vrot.lane.b32.xlu0 %v952, 127
      %v959 = vpop.permute.xlu0 %958
      %960 = vrot.lane.b32.xlu0 %v953, 127
      %v961 = vpop.permute.xlu0 %960
      %962 = vrot.lane.b32.xlu0 %v954, 127
      %v963 = vpop.permute.xlu0 %962
      %v964 = vsel %vm482, %v959, %v961
      %v965 = vsel %vm482, %v961, %v963
      %969 = vst [vmem:[#allocation3 + $0x18] sm:$0xff] %v964
      %970 = vst [vmem:[#allocation3 + $0x20] sm:$0xff] %v965
      %971 = vst.msk [vmem:[#allocation3 + $0x28] sm:$0xff] %vm781, %v963
      %v972 = vld [vmem:[#allocation4] sm:$0xff]
      %v973 = vld [vmem:[#allocation4 + $0x8] sm:$0xff]
      %v974 = vld [vmem:[#allocation4 + $0x10] sm:$0xff]
      %978 = vrot.lane.b32.xlu0 %v972, 126
      %v979 = vpop.permute.xlu0 %978
      %980 = vrot.lane.b32.xlu0 %v973, 126
      %v981 = vpop.permute.xlu0 %980
      %982 = vrot.lane.b32.xlu0 %v974, 126
      %v983 = vpop.permute.xlu0 %982
      %v984 = vsel %vm508, %v979, %v981
      %v985 = vsel %vm508, %v981, %v983
      %989 = vst [vmem:[#allocation3 + $0x30] sm:$0xff] %v984
      %990 = vst [vmem:[#allocation3 + $0x38] sm:$0xff] %v985
      %991 = vst.msk [vmem:[#allocation3 + $0x40] sm:$0xff] %vm781, %v983
      %v992 = vld [vmem:[#allocation4] sm:$0xff]
      %v993 = vld [vmem:[#allocation4 + $0x8] sm:$0xff]
      %v994 = vld [vmem:[#allocation4 + $0x10] sm:$0xff]
      %998 = vrot.lane.b32.xlu0 %v992, 110
      %v999 = vpop.permute.xlu0 %998
      %1000 = vrot.lane.b32.xlu0 %v993, 110
      %v1001 = vpop.permute.xlu0 %1000
      %1002 = vrot.lane.b32.xlu0 %v994, 110
      %v1003 = vpop.permute.xlu0 %1002
      %v1004 = vsel %vm534, %v999, %v1001
      %v1005 = vsel %vm534, %v1001, %v1003
      %1009 = vst [vmem:[#allocation3 + $0x48] sm:$0xff] %v1004
      %1010 = vst [vmem:[#allocation3 + $0x50] sm:$0xff] %v1005
      %1011 = vst.msk [vmem:[#allocation3 + $0x58] sm:$0xff] %vm781, %v1003
      %v1012 = vld [vmem:[#allocation4] sm:$0xff]
      %v1013 = vld [vmem:[#allocation4 + $0x8] sm:$0xff]
      %v1014 = vld [vmem:[#allocation4 + $0x10] sm:$0xff]
      %1018 = vrot.lane.b32.xlu0 %v1012, 109
      %v1019 = vpop.permute.xlu0 %1018
      %1020 = vrot.lane.b32.xlu0 %v1013, 109
      %v1021 = vpop.permute.xlu0 %1020
      %1022 = vrot.lane.b32.xlu0 %v1014, 109
      %v1023 = vpop.permute.xlu0 %1022
      %v1024 = vsel %vm559, %v1019, %v1021
      %v1025 = vsel %vm559, %v1021, %v1023
      %1029 = vst [vmem:[#allocation3 + $0x60] sm:$0xff] %v1024
      %1030 = vst [vmem:[#allocation3 + $0x68] sm:$0xff] %v1025
      %1031 = vst.msk [vmem:[#allocation3 + $0x70] sm:$0xff] %vm781, %v1023
      %v1032 = vld [vmem:[#allocation4] sm:$0xff]
      %v1033 = vld [vmem:[#allocation4 + $0x8] sm:$0xff]
      %v1034 = vld [vmem:[#allocation4 + $0x10] sm:$0xff]
      %1038 = vrot.lane.b32.xlu0 %v1032, 108
      %v1039 = vpop.permute.xlu0 %1038
      %1040 = vrot.lane.b32.xlu0 %v1033, 108
      %v1041 = vpop.permute.xlu0 %1040
      %1042 = vrot.lane.b32.xlu0 %v1034, 108
      %v1043 = vpop.permute.xlu0 %1042
      %v1044 = vsel %vm585, %v1039, %v1041
      %v1045 = vsel %vm585, %v1041, %v1043
      %1049 = vst [vmem:[#allocation3 + $0x78] sm:$0xff] %v1044
      %1050 = vst [vmem:[#allocation3 + $0x80] sm:$0xff] %v1045
      %1051 = vst.msk [vmem:[#allocation3 + $0x88] sm:$0xff] %vm781, %v1043
      %v1052 = vld [vmem:[#allocation4] sm:$0xff]
      %v1053 = vld [vmem:[#allocation4 + $0x8] sm:$0xff]
      %v1054 = vld [vmem:[#allocation4 + $0x10] sm:$0xff]
      %1058 = vrot.lane.b32.xlu0 %v1052, 92
      %v1059 = vpop.permute.xlu0 %1058
      %1060 = vrot.lane.b32.xlu0 %v1053, 92
      %v1061 = vpop.permute.xlu0 %1060
      %1062 = vrot.lane.b32.xlu0 %v1054, 92
      %v1063 = vpop.permute.xlu0 %1062
      %v1064 = vsel %vm610, %v1059, %v1061
      %v1065 = vsel %vm610, %v1061, %v1063
      %1069 = vst [vmem:[#allocation3 + $0x90] sm:$0xff] %v1064
      %1070 = vst [vmem:[#allocation3 + $0x98] sm:$0xff] %v1065
      %1071 = vst.msk [vmem:[#allocation3 + $0xa0] sm:$0xff] %vm781, %v1063
      %v1072 = vld [vmem:[#allocation4] sm:$0xff]
      %v1073 = vld [vmem:[#allocation4 + $0x8] sm:$0xff]
      %v1074 = vld [vmem:[#allocation4 + $0x10] sm:$0xff]
      %1078 = vrot.lane.b32.xlu0 %v1072, 91
      %v1079 = vpop.permute.xlu0 %1078
      %1080 = vrot.lane.b32.xlu0 %v1073, 91
      %v1081 = vpop.permute.xlu0 %1080
      %1082 = vrot.lane.b32.xlu0 %v1074, 91
      %v1083 = vpop.permute.xlu0 %1082
      %v1084 = vsel %vm636, %v1079, %v1081
      %v1085 = vsel %vm636, %v1081, %v1083
      %1089 = vst [vmem:[#allocation3 + $0xa8] sm:$0xff] %v1084
      %1090 = vst [vmem:[#allocation3 + $0xb0] sm:$0xff] %v1085
      %1091 = vst.msk [vmem:[#allocation3 + $0xb8] sm:$0xff] %vm781, %v1083
      %v1092 = vld [vmem:[#allocation4] sm:$0xff]
      %v1093 = vld [vmem:[#allocation4 + $0x8] sm:$0xff]
      %v1094 = vld [vmem:[#allocation4 + $0x10] sm:$0xff]
      %1098 = vrot.lane.b32.xlu0 %v1092, 90
      %v1099 = vpop.permute.xlu0 %1098
      %1100 = vrot.lane.b32.xlu0 %v1093, 90
      %v1101 = vpop.permute.xlu0 %1100
      %1102 = vrot.lane.b32.xlu0 %v1094, 90
      %v1103 = vpop.permute.xlu0 %1102
      %v1104 = vsel %vm661, %v1099, %v1101
      %v1105 = vsel %vm661, %v1101, %v1103
      %1109 = vst [vmem:[#allocation3 + $0xc0] sm:$0xff] %v1104
      %1110 = vst [vmem:[#allocation3 + $0xc8] sm:$0xff] %v1105
      %1111 = vst.msk [vmem:[#allocation3 + $0xd0] sm:$0xff] %vm781, %v1103
      %v1112 = vld [vmem:[%s5] sm:$0xff]
      %v1113 = vld [vmem:[#allocation3] sm:$0xff]
      %v1114 = vld [vmem:[#allocation3 + $0x8] sm:$0xff]
      %v1115 = vld [vmem:[#allocation3 + $0x10] sm:$0xff]
      %v1116 = vld [vmem:[#allocation3 + $0x18] sm:$0xff]
      %v1117 = vld [vmem:[#allocation3 + $0x20] sm:$0xff]
      %v1118 = vld [vmem:[#allocation3 + $0x28] sm:$0xff]
      %v1119 = vld [vmem:[#allocation3 + $0x30] sm:$0xff]
      %v1120 = vld [vmem:[#allocation3 + $0x38] sm:$0xff]
      %v1121 = vld [vmem:[#allocation3 + $0x40] sm:$0xff]
      %v1122 = vld [vmem:[#allocation3 + $0x48] sm:$0xff]
      %v1123 = vld [vmem:[#allocation3 + $0x50] sm:$0xff]
      %v1124 = vld [vmem:[#allocation3 + $0x58] sm:$0xff]
      %v1125 = vld [vmem:[#allocation3 + $0x60] sm:$0xff]
      %v1126 = vld [vmem:[#allocation3 + $0x68] sm:$0xff]
      %v1127 = vld [vmem:[#allocation3 + $0x70] sm:$0xff]
      %v1128 = vld [vmem:[#allocation3 + $0x78] sm:$0xff]
      %v1129 = vld [vmem:[#allocation3 + $0x80] sm:$0xff]
      %v1130 = vld [vmem:[#allocation3 + $0x88] sm:$0xff]
      %v1131 = vld [vmem:[#allocation3 + $0x90] sm:$0xff]
      %v1132 = vld [vmem:[#allocation3 + $0x98] sm:$0xff]
      %v1133 = vld [vmem:[#allocation3 + $0xa0] sm:$0xff]
      %v1134 = vld [vmem:[#allocation3 + $0xa8] sm:$0xff]
      %v1135 = vld [vmem:[#allocation3 + $0xb0] sm:$0xff]
      %v1136 = vld [vmem:[#allocation3 + $0xb8] sm:$0xff]
      %v1137 = vld [vmem:[#allocation3 + $0xc0] sm:$0xff]
      %v1138 = vld [vmem:[#allocation3 + $0xc8] sm:$0xff]
      %v1139 = vld [vmem:[#allocation3 + $0xd0] sm:$0xff]
      %v1140 = vld [vmem:[%s6] sm:$0xff]
      %1142 = vset.pattern.permute.xlu0 0
      %1143 = vperm.xlu0 %1142, %v1140
      %v1144 = vpop.permute.xlu0 %1143
      %vm1146 = vcmask 588800
      %v1148 = vsel %vm1146, %v1112, 0
      %1150 = vmatpush.msra.mxu0 0.0
      %1151 = vmatpush.msra.mxu0 0.0
      %1152 = vmatpush.msra.mxu0 0.0
      %1153 = vmatpush.msra.mxu0 0.0
      %1154 = vmatpush.msra.mxu0 0.0
      %1155 = vmatpush.msra.mxu0 0.0
      %1156 = vmatpush.msra.mxu0 0.0
      %1157 = vmatpush.msra.mxu0 %v1137
      %1158 = vmatpush.msra.mxu0 %v1134
      %1159 = vmatpush.msra.mxu0 %v1131
      %1160 = vmatpush.msra.mxu0 %v1128
      %1161 = vmatpush.msra.mxu0 %v1125
      %1162 = vmatpush.msra.mxu0 %v1122
      %1163 = vmatpush.msra.mxu0 %v1119
      %1164 = vmatpush.msra.mxu0 %v1116
      %1165 = vmatpush.msra.mxu0 %v1113
      %1166 = vmatmul.f32.gmra.mxu0 %v1148
      %v1167 = vpop.f32.mrf.mxu0
      %v1168 = vadd.f32 %v1144, %v1167
      %1169 = vdwg.mxu0
      %1170 = vmatpush.msra.mxu0 0.0
      %1171 = vmatpush.msra.mxu0 0.0
      %1172 = vmatpush.msra.mxu0 0.0
      %1173 = vmatpush.msra.mxu0 0.0
      %1174 = vmatpush.msra.mxu0 0.0
      %1175 = vmatpush.msra.mxu0 0.0
      %1176 = vmatpush.msra.mxu0 0.0
      %1177 = vmatpush.msra.mxu0 %v1138
      %1178 = vmatpush.msra.mxu0 %v1135
      %1179 = vmatpush.msra.mxu0 %v1132
      %1180 = vmatpush.msra.mxu0 %v1129
      %1181 = vmatpush.msra.mxu0 %v1126
      %1182 = vmatpush.msra.mxu0 %v1123
      %1183 = vmatpush.msra.mxu0 %v1120
      %1184 = vmatpush.msra.mxu0 %v1117
      %1185 = vmatpush.msra.mxu0 %v1114
      %1186 = vmatmul.f32.gmra.mxu0 %v1148
      %v1187 = vpop.f32.mrf.mxu0
      %v1188 = vadd.f32 %v1144, %v1187
      %1189 = vdwg.mxu0
      %1190 = vmatpush.msra.mxu0 0.0
      %1191 = vmatpush.msra.mxu0 0.0
      %1192 = vmatpush.msra.mxu0 0.0
      %1193 = vmatpush.msra.mxu0 0.0
      %1194 = vmatpush.msra.mxu0 0.0
      %1195 = vmatpush.msra.mxu0 0.0
      %1196 = vmatpush.msra.mxu0 0.0
      %1197 = vmatpush.msra.mxu0 %v1139
      %1198 = vmatpush.msra.mxu0 %v1136
      %1199 = vmatpush.msra.mxu0 %v1133
      %1200 = vmatpush.msra.mxu0 %v1130
      %1201 = vmatpush.msra.mxu0 %v1127
      %1202 = vmatpush.msra.mxu0 %v1124
      %1203 = vmatpush.msra.mxu0 %v1121
      %1204 = vmatpush.msra.mxu0 %v1118
      %1205 = vmatpush.msra.mxu0 %v1115
      %1206 = vmatmul.f32.gmra.mxu0 %v1148
      %v1207 = vpop.f32.mrf.mxu0
      %v1208 = vadd.f32 %v1144, %v1207
      %1209 = vdwg.mxu0
      %v1210 = vmul.f32 %v1168, %v1168
      %v1211 = vmul.f32 %v1188, %v1188
      %v1212 = vmul.f32 %v1208, %v1208
      %v1213 = vrot.slane %v1210, 4
      %v1214 = vadd.f32 %v1210, %v1213
      %v1215 = vrot.slane %v1214, 2
      %v1216 = vadd.f32 %v1214, %v1215
      %v1217 = vrot.slane %v1216, 1
      %v1218 = vadd.f32 %v1216, %v1217
      %v1219 = vrot.slane %v1211, 4
      %v1220 = vadd.f32 %v1211, %v1219
      %v1221 = vrot.slane %v1220, 2
      %v1222 = vadd.f32 %v1220, %v1221
      %v1223 = vrot.slane %v1222, 1
      %v1224 = vadd.f32 %v1222, %v1223
      %v1225 = vsel %vm781, %v1212, 0.0
      %v1226 = vrot.slane %v1225, 4
      %v1227 = vadd.f32 %v1225, %v1226
      %v1228 = vrot.slane %v1227, 2
      %v1229 = vadd.f32 %v1227, %v1228
      %v1230 = vrot.slane %v1229, 1
      %v1231 = vadd.f32 %v1229, %v1230
      %v1232 = vmax.f32 %v1218, 1e-24
      %v1233 = vmax.f32 %v1224, 1e-24
      %v1234 = vmax.f32 %v1231, 1e-24
      %v1235 = vrsqrt.pop %v1232
      %v1236 = vmul.f32 %v1235, %v1232
      %v1237 = vmul.f32 %v1236, %v1235
      %v1238 = vmul.f32 0.5, %v1237
      %v1239 = vsub.f32 1.5, %v1238
      %v1240 = vmul.f32 %v1235, %v1239
      %vm1241 = vweird.f32 %v1232
      %vm1242 = vweird.f32 %v1235
      %vm1243 = vmor %vm1241, %vm1242
      %v1244 = vsel %vm1243, %v1235, %v1240
      %v1245 = vrsqrt.pop %v1233
      %v1246 = vmul.f32 %v1245, %v1233
      %v1247 = vmul.f32 %v1246, %v1245
      %v1248 = vmul.f32 0.5, %v1247
      %v1249 = vsub.f32 1.5, %v1248
      %v1250 = vmul.f32 %v1245, %v1249
      %vm1251 = vweird.f32 %v1233
      %vm1252 = vweird.f32 %v1245
      %vm1253 = vmor %vm1251, %vm1252
      %v1254 = vsel %vm1253, %v1245, %v1250
      %v1255 = vrsqrt.pop %v1234
      %v1256 = vmul.f32 %v1255, %v1234
      %v1257 = vmul.f32 %v1256, %v1255
      %v1258 = vmul.f32 0.5, %v1257
      %v1259 = vsub.f32 1.5, %v1258
      %v1260 = vmul.f32 %v1255, %v1259
      %vm1261 = vweird.f32 %v1234
      %vm1262 = vweird.f32 %v1255
      %vm1263 = vmor %vm1261, %vm1262
      %v1264 = vsel %vm1263, %v1255, %v1260
      %v1265 = vmul.f32 %v1168, %v1244
      %v1266 = vmul.f32 %v1188, %v1254
      %v1267 = vmul.f32 %v1208, %v1264
      %v1268 = vld [vmem:[%s7] sm:$0xff]
      %1270 = vset.pattern.permute.xlu0 0
      %1271 = vperm.xlu0 %1270, %v1268
      %v1272 = vpop.permute.xlu0 %1271
      %v1274 = vmul.f32 %v1265, %v1272
      %v1275 = vmul.f32 %v1266, %v1272
      %v1276 = vmul.f32 %v1267, %v1272
      %v1277 = vxor.u32 %v1274, 2147483648
      %v1278 = vxor.u32 %v1275, 2147483648
      %v1279 = vxor.u32 %v1276, 2147483648
      %v1280 = vmul.f32 %v1277, 1.442695
      %v1281 = vpow.pop %v1280
      %v1282 = vmul.f32 %v1278, 1.442695
      %v1283 = vpow.pop %v1282
      %v1284 = vmul.f32 %v1279, 1.442695
      %v1285 = vpow.pop %v1284
      %v1286 = vadd.f32 %v1281, 1.0
      %v1287 = vadd.f32 %v1283, 1.0
      %v1288 = vadd.f32 %v1285, 1.0
      %v1289 = vrcp.pop %v1286
      %v1290 = vmul.f32 %v1286, %v1289
      %v1291 = vsub.f32 1.0, %v1290
      %v1292 = vmul.f32 %v1289, %v1291
      %v1293 = vadd.f32 %v1289, %v1292
      %vm1294 = vweird.f32 %v1286
      %vm1295 = vweird.f32 %v1289
      %vm1296 = vmor %vm1294, %vm1295
      %v1297 = vsel %vm1296, %v1289, %v1293
      %v1298 = vand.u32 2147483647, %v1286
      %vm1299 = vcmp.eq.f32.partialorder %v1298, 8.507059e+37
      %v1300 = vand.u32 %v1286, 2147483648
      %v1301 = vor.u32 1.1754944e-38, %v1300
      %v1302 = vsel %vm1299, %v1301, %v1297
      %v1303 = vmul.f32 1.0, %v1302
      %v1304 = vrcp.pop %v1287
      %v1305 = vmul.f32 %v1287, %v1304
      %v1306 = vsub.f32 1.0, %v1305
      %v1307 = vmul.f32 %v1304, %v1306
      %v1308 = vadd.f32 %v1304, %v1307
      %vm1309 = vweird.f32 %v1287
      %vm1310 = vweird.f32 %v1304
      %vm1311 = vmor %vm1309, %vm1310
      %v1312 = vsel %vm1311, %v1304, %v1308
      %v1313 = vand.u32 2147483647, %v1287
      %vm1314 = vcmp.eq.f32.partialorder %v1313, 8.507059e+37
      %v1315 = vand.u32 %v1287, 2147483648
      %v1316 = vor.u32 1.1754944e-38, %v1315
      %v1317 = vsel %vm1314, %v1316, %v1312
      %v1318 = vmul.f32 1.0, %v1317
      %v1319 = vrcp.pop %v1288
      %v1320 = vmul.f32 %v1288, %v1319
      %v1321 = vsub.f32 1.0, %v1320
      %v1322 = vmul.f32 %v1319, %v1321
      %v1323 = vadd.f32 %v1319, %v1322
      %vm1324 = vweird.f32 %v1288
      %vm1325 = vweird.f32 %v1319
      %vm1326 = vmor %vm1324, %vm1325
      %v1327 = vsel %vm1326, %v1319, %v1323
      %v1328 = vand.u32 2147483647, %v1288
      %vm1329 = vcmp.eq.f32.partialorder %v1328, 8.507059e+37
      %v1330 = vand.u32 %v1288, 2147483648
      %v1331 = vor.u32 1.1754944e-38, %v1330
      %v1332 = vsel %vm1329, %v1331, %v1327
      %v1333 = vmul.f32 1.0, %v1332
      %v1334 = vmul.f32 %v1274, %v1303
      %v1335 = vmul.f32 %v1275, %v1318
      %v1336 = vmul.f32 %v1276, %v1333
      %v1337 = vld [vmem:[%s8] sm:$0xff]
      %v1338 = vld [vmem:[%s434] sm:$0xff]
      %v1339 = vld [vmem:[%s434 + $0x8] sm:$0xf]
      %v1340 = vld [vmem:[%s9] sm:$0xff]
      %1342 = vset.pattern.permute.xlu0 0
      %1343 = vperm.xlu0 %1342, %v1340
      %v1344 = vpop.permute.xlu0 %1343
      %1348 = vst [vmem:[#allocation1] ss:$2 sm:$0xff] %v1338
      %s1349 = scalar_lea.vmem [#allocation1], 16
      %1350 = vst [vmem:[%s1349] ss:$2 sm:$0xff] %v1339
      %v1351 = vld.sshfl [vmem:[#allocation1] sm:$0xff pattern:$0x75316420]
      %v1352 = vld.sshfl [vmem:[#allocation1 + $0x8] sm:$0xff pattern:$0x75316420]
      %v1353 = vld.sshfl [vmem:[#allocation1 + $0x10] sm:$0xff pattern:$0x75316420]
      %1354 = vrot.lane.b32.xlu0 %v1351, 109
      %v1355 = vpop.permute.xlu0 %1354
      %1356 = vrot.lane.b32.xlu0 %v1352, 109
      %v1357 = vpop.permute.xlu0 %1356
      %1358 = vrot.lane.b32.xlu0 %v1353, 109
      %v1359 = vpop.permute.xlu0 %1358
      %v1360 = vsel %vm559, %v1355, %v1357
      %v1361 = vsel %vm559, %v1357, %v1359
      %vm1362 = vcmask 31744
      %v1364 = vsel %vm1362, %v1337, 0
      %v1366 = vsel %vm696, %v1360, 0
      %v1368 = vsel %vm696, %v1361, 0
      %v1370 = vsel %vm696, %v1359, 0
      %1372 = vmatpush.msra.mxu0 0.0
      %1373 = vmatpush.msra.mxu0 0.0
      %1374 = vmatpush.msra.mxu0 0.0
      %1375 = vmatpush.msra.mxu0 0.0
      %1376 = vmatpush.msra.mxu0 0.0
      %1377 = vmatpush.msra.mxu0 0.0
      %1378 = vmatpush.msra.mxu0 0.0
      %1379 = vmatpush.msra.mxu0 0.0
      %1380 = vmatpush.msra.mxu0 0.0
      %1381 = vmatpush.msra.mxu0 0.0
      %1382 = vmatpush.msra.mxu0 0.0
      %1383 = vmatpush.msra.mxu0 0.0
      %1384 = vmatpush.msra.mxu0 0.0
      %1385 = vmatpush.msra.mxu0 0.0
      %1386 = vmatpush.msra.mxu0 0.0
      %1387 = vmatpush.msra.mxu0 %v1366
      %1388 = vmatmul.f32.gmra.mxu0 %v1364
      %v1389 = vpop.f32.mrf.mxu0
      %v1390 = vadd.f32 %v1344, %v1389
      %1391 = vdwg.mxu0
      %1392 = vmatpush.msra.mxu0 0.0
      %1393 = vmatpush.msra.mxu0 0.0
      %1394 = vmatpush.msra.mxu0 0.0
      %1395 = vmatpush.msra.mxu0 0.0
      %1396 = vmatpush.msra.mxu0 0.0
      %1397 = vmatpush.msra.mxu0 0.0
      %1398 = vmatpush.msra.mxu0 0.0
      %1399 = vmatpush.msra.mxu0 0.0
      %1400 = vmatpush.msra.mxu0 0.0
      %1401 = vmatpush.msra.mxu0 0.0
      %1402 = vmatpush.msra.mxu0 0.0
      %1403 = vmatpush.msra.mxu0 0.0
      %1404 = vmatpush.msra.mxu0 0.0
      %1405 = vmatpush.msra.mxu0 0.0
      %1406 = vmatpush.msra.mxu0 0.0
      %1407 = vmatpush.msra.mxu0 %v1368
      %1408 = vmatmul.f32.gmra.mxu0 %v1364
      %v1409 = vpop.f32.mrf.mxu0
      %v1410 = vadd.f32 %v1344, %v1409
      %1411 = vdwg.mxu0
      %1412 = vmatpush.msra.mxu0 0.0
      %1413 = vmatpush.msra.mxu0 0.0
      %1414 = vmatpush.msra.mxu0 0.0
      %1415 = vmatpush.msra.mxu0 0.0
      %1416 = vmatpush.msra.mxu0 0.0
      %1417 = vmatpush.msra.mxu0 0.0
      %1418 = vmatpush.msra.mxu0 0.0
      %1419 = vmatpush.msra.mxu0 0.0
      %1420 = vmatpush.msra.mxu0 0.0
      %1421 = vmatpush.msra.mxu0 0.0
      %1422 = vmatpush.msra.mxu0 0.0
      %1423 = vmatpush.msra.mxu0 0.0
      %1424 = vmatpush.msra.mxu0 0.0
      %1425 = vmatpush.msra.mxu0 0.0
      %1426 = vmatpush.msra.mxu0 0.0
      %1427 = vmatpush.msra.mxu0 %v1370
      %1428 = vmatmul.f32.gmra.mxu0 %v1364
      %v1429 = vpop.f32.mrf.mxu0
      %v1430 = vadd.f32 %v1344, %v1429
      %1431 = vdwg.mxu0
      %v1432 = vadd.f32 %v1334, %v1390
      %v1433 = vadd.f32 %v1335, %v1410
      %v1434 = vadd.f32 %v1336, %v1430
      %1435 = vst [vmem:[%s447] sm:$0xff] %v1432
      %1436 = vst [vmem:[%s447 + $0x8] sm:$0xff] %v1433
      %1437 = vst.msk [vmem:[%s447 + $0x10] sm:$0xff] %vm781, %v1434
      %p1438 = scmp.lt.s32.totalorder %s23, 1
      %s1439 = scalar_select %p1438, %s23, 1
      %s1440 = smul.addr %s1439, 3
      %s1441 = smul.addr %s1440, 8
      %s1442 = scalar_lea.vmem %s12, %s1441
      // Predicated region
      $region69: #{resnet_block_forward.1} parent=67 // pred_check
        %p1443 = pneg %p308
      $region70: #{resnet_block_forward.1} parent=67 // pred_check_branch
        %1445 = sbr.rel (%p1443) target = $region72
      $region71: #{resnet_block_forward.1} parent=67 // pred_region
        _
      $region72: #{resnet_block_forward.1} parent=67 // pred_fallthru
        _
    $region68: #{resnet_block_forward.1} parent=5 // pred_fallthru
      _
    %p1446 = scmp.le.s32.totalorder 2, %s18
    // Predicated region
    $region73: #{resnet_block_forward.1} parent=5 // pred_check
      %p1447 = pneg %p1446
    $region74: #{resnet_block_forward.1} parent=5 // pred_check_branch
      %1449 = sbr.rel (%p1447) target = $region76
    $region75: #{resnet_block_forward.1} parent=5 // pred_region
      %s1450 = ssub.s32 %s18, 2
      // Predicated region
      $region77: #{resnet_block_forward.1} parent=75 // pred_check
        %p1451 = pneg %p314
      $region78: #{resnet_block_forward.1} parent=75 // pred_check_branch
        %1453 = sbr.rel (%p1451) target = $region80
      $region79: #{resnet_block_forward.1} parent=75 // pred_region
        %p1454 = scmp.lt.s32.totalorder %s24, 1
        %s1455 = scalar_select %p1454, %s24, 1
        %s1456 = smul.addr %s1455, 3
        %s1457 = smul.addr %s1456, 8
        %s1458 = scalar_lea.vmem %s12, %s1457
      $region80: #{resnet_block_forward.1} parent=75 // pred_fallthru
        _
    $region76: #{resnet_block_forward.1} parent=5 // pred_fallthru
      _
  $region6: #{resnet_block_forward.1} parent=0 // loop_footer
    %s22 = sadd.s32 1, %s18
  $region7: #{resnet_block_forward.1} parent=0 // loop_footer_branch
    %17 = sbr.rel target = $region3
  $region8: #{resnet_block_forward.1} parent=0 // loop_exit
    _

</llo_original>
